<compile_context>
chip_gen: v5e
topology: v5e:2x2
jax: 0.10.0
libtpu: 0.0.40
codegen_flags: <defaults>
</compile_context>

<pallas_src>
import jax
import jax.numpy as jnp
from jax.experimental import pallas as pl
from jax.experimental.pallas import tpu as pltpu

# ---------------------------------------------------------------------------
# model dimensions (from the PyTorch module __init__)
# ---------------------------------------------------------------------------
IN1, OUT1 = 18, 10          # nnconv1
IN2, OUT2 = 10, 7           # nnconv2
EDGE_DIM = 4                # edge_attr features
H1, H2, H3 = 20, 10, 1      # w1 / w2 / w3


def _r8(n):
    return -(-n // 8) * 8


# sublane-padded channel counts (so every in-kernel concat / slice is 8-aligned)
IN1_P, OUT1_P = _r8(IN1), _r8(OUT1)      # 24, 16
IN2_P = OUT1_P                            # layer-2 input = padded layer-1 output (16)
OUT2_P = _r8(OUT2)                        # 8
H1_P, H2_P, H3_P = _r8(H1), _r8(H2), _r8(H3)   # 24, 16, 8

# ---------------------------------------------------------------------------
# single resident weight slab: (SLAB_ROWS, 128) f32, zero-padded pieces
# ---------------------------------------------------------------------------
SLAB_LANES = 128
_PIECES = [                     # name -> stored (rows, cols) inside the slab
    ("WsT1",   OUT1, 5 * IN1_P),   # (10, 120)  [bias ; W_0..W_3]^T, per-block padded
    ("rootT1", OUT1, IN1),         # (10, 18)
    ("cb1",    OUT1, 1),
    ("WsT2",   OUT2, 5 * IN2_P),   # (7, 80)
    ("rootT2", OUT2, IN2),         # (7, 10)
    ("cb2",    OUT2, 1),
    ("w1",     H1, OUT2),          # (20, 7)
    ("b1",     H1, 1),
    ("w2",     H2, H1),            # (10, 20)
    ("b2",     H2, 1),
    ("w3",     H3, H2),            # (1, 10)
    ("b3",     H3, 1),
]
_OFF = {}
_off = 0
for _n, _r, _c in _PIECES:
    _OFF[_n] = _off
    _off += _r8(_r)
SLAB_ROWS = _off                 # 168


def _edge_weight_stack(nn_w, nn_b, in_c, out_c, in_pad):
    """PyG NNConv edge-MLP weight as [bias ; W_0 ; ... ; W_3]^T with 8-aligned blocks.

    wflat_e = ea_e @ nn_w.T + nn_b ; view(-1, in, out) ==> W_k = nn_w[:, k].reshape(in, out).
    """
    blocks = [nn_b.reshape(in_c, out_c)] + [
        nn_w[:, k].reshape(in_c, out_c) for k in range(EDGE_DIM)
    ]
    blocks = [jnp.pad(b, ((0, in_pad - in_c), (0, 0))) for b in blocks]
    return jnp.concatenate(blocks, axis=0).T            # (out_c, 5*in_pad)


def _build_weight_slab(p):
    pieces = {
        "WsT1": _edge_weight_stack(p["nn1_w"], p["nn1_b"], IN1, OUT1, IN1_P),
        "rootT1": p["root1"].T,
        "cb1": p["cb1"].reshape(OUT1, 1),
        "WsT2": _edge_weight_stack(p["nn2_w"], p["nn2_b"], IN2, OUT2, IN2_P),
        "rootT2": p["root2"].T,
        "cb2": p["cb2"].reshape(OUT2, 1),
        "w1": p["w1"], "b1": p["b1"].reshape(H1, 1),
        "w2": p["w2"], "b2": p["b2"].reshape(H2, 1),
        "w3": p["w3"], "b3": p["b3"].reshape(H3, 1),
    }
    slab = jnp.zeros((SLAB_ROWS, SLAB_LANES), jnp.float32)
    for name, rows, cols in _PIECES:
        a = pieces[name].astype(jnp.float32)
        assert a.shape == (rows, cols), (name, a.shape, rows, cols)
        slab = slab.at[_OFF[name]:_OFF[name] + rows, :cols].set(a)
    return slab


# ---------------------------------------------------------------------------
# Pallas kernel: G graphs per grid step, channels-on-sublanes orientation
# ---------------------------------------------------------------------------
def _forward_kernel(xT_ref, S_ref, D_ref, eaT_ref, wslab_ref, poolT_ref, out_ref):
    # xT   : (IN1_P, G*N)  f32  (padded channel rows are zero)
    # S    : (G*N, G*E)    bf16 block-diag gather one-hot  S[n,e] = [src_e == n]
    # D    : (G*E, G*N)    bf16 block-diag scatter one-hot D[e,n] = [dst_e == n]
    # eaT  : (EDGE_DIM, G*E) f32
    # poolT: (G*N, G)      f32  per-graph mean-pool matrix (1/N in graph blocks)
    S = S_ref[...].astype(jnp.float32)     # exact 0/1; f32 accumulate on MXU
    D = D_ref[...].astype(jnp.float32)
    eaT = eaT_ref[...]

    def piece(name, rows, cols):
        off = _OFF[name]
        return wslab_ref[off:off + rows, 0:cols]   # static, sublane-aligned view

    def nnconv_T(hT, in_p, out_p, wname, rname, bname):
        # gather source-node features (MXU): (in_p, G*E)
        hjT = jnp.dot(hT, S, preferred_element_type=jnp.float32)
        # single message contraction: A^T = [hj^T ; ea_k * hj^T]_k  (8-aligned concat)
        AT = jnp.concatenate(
            [hjT] + [eaT[k:k + 1, :] * hjT for k in range(EDGE_DIM)], axis=0)
        mT = jnp.dot(piece(wname, out_p, 5 * in_p), AT,
                     preferred_element_type=jnp.float32)         # (out_p, G*E)
        # scatter-add to target nodes (MXU): (out_p, G*N)
        aggT = jnp.dot(mT, D, preferred_element_type=jnp.float32)
        # root (self) transform + bias; padded rows stay exactly zero
        selfT = jnp.dot(piece(rname, out_p, in_p), hT,
                        preferred_element_type=jnp.float32)
        return aggT + selfT + piece(bname, out_p, 1)

    h1T = nnconv_T(xT_ref[...], IN1_P, OUT1_P, "WsT1", "rootT1", "cb1")
    h2T = nnconv_T(h1T, IN2_P, OUT2_P, "WsT2", "rootT2", "cb2")

    # per-graph mean pool as a matmul: (OUT2_P, G)
    pooledT = jnp.dot(h2T, poolT_ref[...], preferred_element_type=jnp.float32)

    z1 = jnp.maximum(
        jnp.dot(piece("w1", H1_P, OUT2_P), pooledT,
                preferred_element_type=jnp.float32) + piece("b1", H1_P, 1), 0.0)
    z2 = jnp.maximum(
        jnp.dot(piece("w2", H2_P, H1_P), z1,
                preferred_element_type=jnp.float32) + piece("b2", H2_P, 1), 0.0)
    z3 = jnp.dot(piece("w3", H3_P, H2_P), z2,
                 preferred_element_type=jnp.float32) + piece("b3", H3_P, 1)

    out_ref[...] = jax.nn.sigmoid(z3[0:1, :])    # lane-dense (1, G) store


# ---------------------------------------------------------------------------
# wrapper: host-side packing + pallas_call (G graphs per grid step)
# ---------------------------------------------------------------------------
def neural_network_forward(x, edge_index, edge_attr, params, graphs_per_step=None):
    """x: (B,N,18) or (N,18); edge_index: (B,2,E) or (2,E); edge_attr: (B,E,4) or (E,4)."""
    single = (x.ndim == 2)
    if single:
        x, edge_index, edge_attr = x[None], edge_index[None], edge_attr[None]
    B, N, _ = x.shape
    E = edge_index.shape[-1]

    # graphs per step: target G*N ~= 256 sublane/lane rows (one v6e/v7x MXU
    # pass; two 128 passes on v5e), clamped to the batch.
    if graphs_per_step is None:
        G = max(1, min(B, max(1, 256 // max(N, 1))))
    else:
        G = max(1, min(B, int(graphs_per_step)))
    C = -(-B // G)                       # grid steps
    B_pad = C * G
    if B_pad != B:                       # pad with dummy graphs (outputs discarded;
        pad = B_pad - B                  # block-diagonal one-hots keep them isolated)
        x = jnp.concatenate([x, jnp.zeros((pad, N, IN1), x.dtype)], 0)
        edge_index = jnp.concatenate(
            [edge_index, jnp.zeros((pad, 2, E), edge_index.dtype)], 0)
        edge_attr = jnp.concatenate(
            [edge_attr, jnp.zeros((pad, E, EDGE_DIM), edge_attr.dtype)], 0)

    GN, GE = G * N, G * E

    # --- per-chunk graph operands, transposed (channels on sublanes) -------
    xT = jnp.swapaxes(x.astype(jnp.float32).reshape(C, GN, IN1), 1, 2)     # (C, IN1, GN)
    xT = jnp.pad(xT, ((0, 0), (0, IN1_P - IN1), (0, 0)))                    # (C, IN1_P, GN)
    eaT = jnp.swapaxes(edge_attr.astype(jnp.float32).reshape(C, GE, EDGE_DIM), 1, 2)

    ei = edge_index.reshape(C, G, 2, E)
    offs = (jnp.arange(G, dtype=ei.dtype) * N)[None, :, None]
    src_g = (ei[:, :, 0, :] + offs).reshape(C, GE)
    dst_g = (ei[:, :, 1, :] + offs).reshape(C, GE)
    # block-diagonal one-hots in bf16 (exact 0/1, half the HBM bytes)
    S = jnp.swapaxes(jax.nn.one_hot(src_g, GN, dtype=jnp.bfloat16), 1, 2)   # (C, GN, GE)
    D = jax.nn.one_hot(dst_g, GN, dtype=jnp.bfloat16)                       # (C, GE, GN)

    wslab = _build_weight_slab(params)                                      # (168, 128)
    poolT = jnp.kron(jnp.eye(G, dtype=jnp.float32),
                     jnp.full((N, 1), 1.0 / N, jnp.float32))                # (GN, G)

    in_specs = [
        pl.BlockSpec((None, IN1_P, GN), lambda b: (b, 0, 0)),
        pl.BlockSpec((None, GN, GE), lambda b: (b, 0, 0)),
        pl.BlockSpec((None, GE, GN), lambda b: (b, 0, 0)),
        pl.BlockSpec((None, EDGE_DIM, GE), lambda b: (b, 0, 0)),
        pl.BlockSpec((SLAB_ROWS, SLAB_LANES), lambda b: (0, 0)),   # resident
        pl.BlockSpec((GN, G), lambda b: (0, 0)),                   # resident
    ]
    out_spec = pl.BlockSpec((None, 1, G), lambda b: (b, 0, 0))

    # cost estimate (padded dims; per chunk)
    f = 0
    for in_p, out_p in ((IN1_P, OUT1_P), (IN2_P, OUT2_P)):
        f += 2 * in_p * GN * GE                 # gather
        f += 2 * out_p * (5 * in_p) * GE        # message contraction
        f += 2 * out_p * GE * GN                # scatter-add
        f += 2 * out_p * in_p * GN              # root transform
    f += 2 * OUT2_P * GN * G                    # mean pool
    f += 2 * (H1_P * OUT2_P + H2_P * H1_P + H3_P * H2_P) * G
    args = (xT, S, D, eaT, wslab, poolT)
    bytes_accessed = sum(int(a.size) * a.dtype.itemsize for a in args) + C * G * 4
    cost = pl.CostEstimate(flops=C * f, transcendentals=C * G,
                           bytes_accessed=bytes_accessed)

    out = pl.pallas_call(
        _forward_kernel,
        out_shape=jax.ShapeDtypeStruct((C, 1, G), jnp.float32),
        grid=(C,),
        in_specs=in_specs,
        out_specs=out_spec,
        compiler_params=pltpu.CompilerParams(
            dimension_semantics=("parallel",),       # shards chunks across TCs on v7x
            vmem_limit_bytes=32 * 1024 * 1024,       # ~1 MiB/step actual; fits v7x 64 MiB
        ),
        cost_estimate=cost,
    )(*args)

    return out.reshape(C * G)[:B].reshape(B, 1)


# ---------------------------------------------------------------------------
# pure-JAX reference (same math, single graph) for a correctness check
# ---------------------------------------------------------------------------
def reference_forward(x, edge_index, edge_attr, params):
    p = params

    def nnconv(h, in_c, out_c, nn_w, nn_b, root, bias):
        wflat = edge_attr @ nn_w.T + nn_b                     # (E, in*out)
        w = wflat.reshape(-1, in_c, out_c)                    # (E, in, out)
        hj = h[edge_index[0]]                                 # (E, in)
        m = jnp.einsum("ei,eio->eo", hj, w)                   # (E, out)
        agg = jnp.zeros((h.shape[0], out_c), jnp.float32).at[edge_index[1]].add(m)
        return agg + h @ root + bias

    h1 = nnconv(x, IN1, OUT1, p["nn1_w"], p["nn1_b"], p["root1"], p["cb1"])
    h2 = nnconv(h1, IN2, OUT2, p["nn2_w"], p["nn2_b"], p["root2"], p["cb2"])
    pooled = jnp.mean(h2, axis=0, keepdims=True)
    z1 = jax.nn.relu(pooled @ p["w1"].T + p["b1"])
    z2 = jax.nn.relu(z1 @ p["w2"].T + p["b2"])
    return jax.nn.sigmoid(z2 @ p["w3"].T + p["b3"])


def init_params(key):
    def lin(k, out_f, in_f, scale=0.1):
        kw, kb = jax.random.split(k)
        return (jax.random.normal(kw, (out_f, in_f), jnp.float32) * scale,
                jax.random.normal(kb, (out_f,), jnp.float32) * scale)

    ks = jax.random.split(key, 9)
    nn1_w, nn1_b = lin(ks[0], IN1 * OUT1, EDGE_DIM)        # Linear(4, 180)
    nn2_w, nn2_b = lin(ks[1], IN2 * OUT2, EDGE_DIM)        # Linear(4, 70)
    root1 = jax.random.normal(ks[2], (IN1, OUT1), jnp.float32) * 0.1
    cb1 = jax.random.normal(ks[3], (OUT1,), jnp.float32) * 0.1
    root2 = jax.random.normal(ks[4], (IN2, OUT2), jnp.float32) * 0.1
    cb2 = jax.random.normal(ks[5], (OUT2,), jnp.float32) * 0.1
    w1, b1 = lin(ks[6], H1, OUT2)                          # Linear(7, 20)
    w2, b2 = lin(ks[7], H2, H1)                            # Linear(20, 10)
    w3, b3 = lin(ks[8], H3, H2)                            # Linear(10, 1)
    return dict(nn1_w=nn1_w, nn1_b=nn1_b, root1=root1, cb1=cb1,
                nn2_w=nn2_w, nn2_b=nn2_b, root2=root2, cb2=cb2,
                w1=w1, b1=b1, w2=w2, b2=b2, w3=w3, b3=b3)


if __name__ == "__main__":
    key = jax.random.PRNGKey(0)
    k_p, k_x, k_e, k_a = jax.random.split(key, 4)

    B, N, E = 64, 8, 16          # 64 graphs -> G=32 per step, 2 parallel grid steps
    params = init_params(k_p)
    x = jax.random.normal(k_x, (B, N, IN1), jnp.float32)
    edge_index = jax.random.randint(k_e, (B, 2, E), 0, N, dtype=jnp.int32)
    edge_attr = jax.random.normal(k_a, (B, E, EDGE_DIM), jnp.float32)

    ref = jax.vmap(lambda xb, eib, eab: reference_forward(xb, eib, eab, params))(
        x, edge_index, edge_attr).reshape(B, 1)

    # batched kernel (32 graphs per grid step, lane-dense (1,32) output blocks)
    out = jax.block_until_ready(neural_network_forward(x, edge_index, edge_attr, params))
    assert out.shape == (B, 1), out.shape
    assert jnp.allclose(out, ref, atol=1e-3, rtol=1e-3), (out[:4], ref[:4])

    # odd batch: exercises dummy-graph padding of the last chunk
    B_odd = 37
    out_odd = jax.block_until_ready(
        neural_network_forward(x[:B_odd], edge_index[:B_odd], edge_attr[:B_odd], params))
    assert out_odd.shape == (B_odd, 1), out_odd.shape
    assert jnp.allclose(out_odd, ref[:B_odd], atol=1e-3, rtol=1e-3)

    # single-graph path (original module semantics)
    out1 = jax.block_until_ready(
        neural_network_forward(x[0], edge_index[0], edge_attr[0], params))
    assert out1.shape == (1, 1), out1.shape
    assert jnp.allclose(out1, ref[:1], atol=1e-3, rtol=1e-3), (out1, ref[:1])

    print("KERNEL_OK")
</pallas_src>

<mosaic_0001>
module attributes {stable_mosaic.version = 11 : i64} {
  func.func @_forward_kernel(%arg0: i32, %arg1: memref<1x24x256xf32, #tpu.memory_space<vmem>>, %arg2: memref<1x256x512xbf16, #tpu.memory_space<vmem>>, %arg3: memref<1x512x256xbf16, #tpu.memory_space<vmem>>, %arg4: memref<1x4x512xf32, #tpu.memory_space<vmem>>, %arg5: memref<168x128xf32, #tpu.memory_space<vmem>>, %arg6: memref<256x32xf32, #tpu.memory_space<vmem>>, %arg7: memref<1x1x32xf32, #tpu.memory_space<vmem>>) attributes {dimension_semantics = [#tpu.dimension_semantics<parallel>], iteration_bounds = array<i64: 2>, scalar_prefetch = 0 : i64, scratch_operands = 0 : i64, tpu.core_type = #tpu.core_type<tc>, window_params = [{transform_indices = @transform_0, window_bounds = array<i64: 1, 24, 256>}, {transform_indices = @transform_1, window_bounds = array<i64: 1, 256, 512>}, {transform_indices = @transform_2, window_bounds = array<i64: 1, 512, 256>}, {transform_indices = @transform_3, window_bounds = array<i64: 1, 4, 512>}, {pipeline_mode = #tpu.pipeline_mode<synchronous>, transform_indices = @transform_4, window_bounds = array<i64: 168, 128>}, {pipeline_mode = #tpu.pipeline_mode<synchronous>, transform_indices = @transform_5, window_bounds = array<i64: 256, 32>}, {transform_indices = @transform_6, window_bounds = array<i64: 1, 1, 32>}]} {
    %c0 = arith.constant 0 : index
    %c0_0 = arith.constant 0 : index
    %c0_1 = arith.constant 0 : index
    %0 = vector.load %arg2[%c0, %c0_0, %c0_1] : memref<1x256x512xbf16, #tpu.memory_space<vmem>>, vector<1x256x512xbf16>
    %1 = vector.shape_cast %0 : vector<1x256x512xbf16> to vector<256x512xbf16>
    %2 = arith.extf %1 : vector<256x512xbf16> to vector<256x512xf32>
    %c0_2 = arith.constant 0 : index
    %c0_3 = arith.constant 0 : index
    %c0_4 = arith.constant 0 : index
    %3 = vector.load %arg3[%c0_2, %c0_3, %c0_4] : memref<1x512x256xbf16, #tpu.memory_space<vmem>>, vector<1x512x256xbf16>
    %4 = vector.shape_cast %3 : vector<1x512x256xbf16> to vector<512x256xbf16>
    %5 = arith.extf %4 : vector<512x256xbf16> to vector<512x256xf32>
    %c0_5 = arith.constant 0 : index
    %c0_6 = arith.constant 0 : index
    %c0_7 = arith.constant 0 : index
    %6 = vector.load %arg4[%c0_5, %c0_6, %c0_7] : memref<1x4x512xf32, #tpu.memory_space<vmem>>, vector<1x4x512xf32>
    %7 = vector.shape_cast %6 : vector<1x4x512xf32> to vector<4x512xf32>
    %c0_8 = arith.constant 0 : index
    %c0_9 = arith.constant 0 : index
    %c0_10 = arith.constant 0 : index
    %8 = vector.load %arg1[%c0_8, %c0_9, %c0_10] : memref<1x24x256xf32, #tpu.memory_space<vmem>>, vector<1x24x256xf32>
    %9 = vector.shape_cast %8 : vector<1x24x256xf32> to vector<24x256xf32>
    %cst = arith.constant dense<0.000000e+00> : vector<24x512xf32>
    %10 = tpu.matmul %9, %2, %cst {dimension_numbers = #tpu.dot_dimension_numbers<[1], [0], [0], [1], [0, 0, 1, 1], [], []>} : vector<24x256xf32>, vector<256x512xf32>, vector<24x512xf32> -> vector<24x512xf32>
    %11 = vector.extract_strided_slice %7 {offsets = [0, 0], sizes = [1, 512], strides = [1, 1]} : vector<4x512xf32> to vector<1x512xf32>
    %12 = vector.broadcast %11 : vector<1x512xf32> to vector<24x512xf32>
    %13 = arith.mulf %12, %10 : vector<24x512xf32>
    %14 = vector.extract_strided_slice %7 {offsets = [1, 0], sizes = [1, 512], strides = [1, 1]} : vector<4x512xf32> to vector<1x512xf32>
    %15 = vector.broadcast %14 : vector<1x512xf32> to vector<24x512xf32>
    %16 = arith.mulf %15, %10 : vector<24x512xf32>
    %17 = vector.extract_strided_slice %7 {offsets = [2, 0], sizes = [1, 512], strides = [1, 1]} : vector<4x512xf32> to vector<1x512xf32>
    %18 = vector.broadcast %17 : vector<1x512xf32> to vector<24x512xf32>
    %19 = arith.mulf %18, %10 : vector<24x512xf32>
    %20 = vector.extract_strided_slice %7 {offsets = [3, 0], sizes = [1, 512], strides = [1, 1]} : vector<4x512xf32> to vector<1x512xf32>
    %21 = vector.broadcast %20 : vector<1x512xf32> to vector<24x512xf32>
    %22 = arith.mulf %21, %10 : vector<24x512xf32>
    %23 = tpu.concatenate %10, %13, %16, %19, %22 in 0 : vector<24x512xf32>, vector<24x512xf32>, vector<24x512xf32>, vector<24x512xf32>, vector<24x512xf32> -> vector<120x512xf32>
    %c0_11 = arith.constant 0 : index
    %c0_12 = arith.constant 0 : index
    %24 = vector.load %arg5[%c0_11, %c0_12] : memref<168x128xf32, #tpu.memory_space<vmem>>, vector<16x120xf32>
    %cst_13 = arith.constant dense<0.000000e+00> : vector<16x512xf32>
    %25 = tpu.matmul %24, %23, %cst_13 {dimension_numbers = #tpu.dot_dimension_numbers<[1], [0], [0], [1], [0, 0, 1, 1], [], []>} : vector<16x120xf32>, vector<120x512xf32>, vector<16x512xf32> -> vector<16x512xf32>
    %cst_14 = arith.constant dense<0.000000e+00> : vector<16x256xf32>
    %26 = tpu.matmul %25, %5, %cst_14 {dimension_numbers = #tpu.dot_dimension_numbers<[1], [0], [0], [1], [0, 0, 1, 1], [], []>} : vector<16x512xf32>, vector<512x256xf32>, vector<16x256xf32> -> vector<16x256xf32>
    %c16 = arith.constant 16 : index
    %c0_15 = arith.constant 0 : index
    %27 = vector.load %arg5[%c16, %c0_15] : memref<168x128xf32, #tpu.memory_space<vmem>>, vector<16x24xf32>
    %cst_16 = arith.constant dense<0.000000e+00> : vector<16x256xf32>
    %28 = tpu.matmul %27, %9, %cst_16 {dimension_numbers = #tpu.dot_dimension_numbers<[1], [0], [0], [1], [0, 0, 1, 1], [], []>} : vector<16x24xf32>, vector<24x256xf32>, vector<16x256xf32> -> vector<16x256xf32>
    %29 = arith.addf %26, %28 : vector<16x256xf32>
    %c32 = arith.constant 32 : index
    %c0_17 = arith.constant 0 : index
    %30 = vector.load %arg5[%c32, %c0_17] : memref<168x128xf32, #tpu.memory_space<vmem>>, vector<16x1xf32>
    %31 = vector.broadcast %30 : vector<16x1xf32> to vector<16x256xf32>
    %32 = arith.addf %29, %31 : vector<16x256xf32>
    %cst_18 = arith.constant dense<0.000000e+00> : vector<16x512xf32>
    %33 = tpu.matmul %32, %2, %cst_18 {dimension_numbers = #tpu.dot_dimension_numbers<[1], [0], [0], [1], [0, 0, 1, 1], [], []>} : vector<16x256xf32>, vector<256x512xf32>, vector<16x512xf32> -> vector<16x512xf32>
    %34 = vector.extract_strided_slice %7 {offsets = [0, 0], sizes = [1, 512], strides = [1, 1]} : vector<4x512xf32> to vector<1x512xf32>
    %35 = vector.broadcast %34 : vector<1x512xf32> to vector<16x512xf32>
    %36 = arith.mulf %35, %33 : vector<16x512xf32>
    %37 = vector.extract_strided_slice %7 {offsets = [1, 0], sizes = [1, 512], strides = [1, 1]} : vector<4x512xf32> to vector<1x512xf32>
    %38 = vector.broadcast %37 : vector<1x512xf32> to vector<16x512xf32>
    %39 = arith.mulf %38, %33 : vector<16x512xf32>
    %40 = vector.extract_strided_slice %7 {offsets = [2, 0], sizes = [1, 512], strides = [1, 1]} : vector<4x512xf32> to vector<1x512xf32>
    %41 = vector.broadcast %40 : vector<1x512xf32> to vector<16x512xf32>
    %42 = arith.mulf %41, %33 : vector<16x512xf32>
    %43 = vector.extract_strided_slice %7 {offsets = [3, 0], sizes = [1, 512], strides = [1, 1]} : vector<4x512xf32> to vector<1x512xf32>
    %44 = vector.broadcast %43 : vector<1x512xf32> to vector<16x512xf32>
    %45 = arith.mulf %44, %33 : vector<16x512xf32>
    %46 = tpu.concatenate %33, %36, %39, %42, %45 in 0 : vector<16x512xf32>, vector<16x512xf32>, vector<16x512xf32>, vector<16x512xf32>, vector<16x512xf32> -> vector<80x512xf32>
    %c48 = arith.constant 48 : index
    %c0_19 = arith.constant 0 : index
    %47 = vector.load %arg5[%c48, %c0_19] : memref<168x128xf32, #tpu.memory_space<vmem>>, vector<8x80xf32>
    %cst_20 = arith.constant dense<0.000000e+00> : vector<8x512xf32>
    %48 = tpu.matmul %47, %46, %cst_20 {dimension_numbers = #tpu.dot_dimension_numbers<[1], [0], [0], [1], [0, 0, 1, 1], [], []>} : vector<8x80xf32>, vector<80x512xf32>, vector<8x512xf32> -> vector<8x512xf32>
    %cst_21 = arith.constant dense<0.000000e+00> : vector<8x256xf32>
    %49 = tpu.matmul %48, %5, %cst_21 {dimension_numbers = #tpu.dot_dimension_numbers<[1], [0], [0], [1], [0, 0, 1, 1], [], []>} : vector<8x512xf32>, vector<512x256xf32>, vector<8x256xf32> -> vector<8x256xf32>
    %c56 = arith.constant 56 : index
    %c0_22 = arith.constant 0 : index
    %50 = vector.load %arg5[%c56, %c0_22] : memref<168x128xf32, #tpu.memory_space<vmem>>, vector<8x16xf32>
    %cst_23 = arith.constant dense<0.000000e+00> : vector<8x256xf32>
    %51 = tpu.matmul %50, %32, %cst_23 {dimension_numbers = #tpu.dot_dimension_numbers<[1], [0], [0], [1], [0, 0, 1, 1], [], []>} : vector<8x16xf32>, vector<16x256xf32>, vector<8x256xf32> -> vector<8x256xf32>
    %52 = arith.addf %49, %51 : vector<8x256xf32>
    %c64 = arith.constant 64 : index
    %c0_24 = arith.constant 0 : index
    %53 = vector.load %arg5[%c64, %c0_24] : memref<168x128xf32, #tpu.memory_space<vmem>>, vector<8x1xf32>
    %54 = vector.broadcast %53 : vector<8x1xf32> to vector<8x256xf32>
    %55 = arith.addf %52, %54 : vector<8x256xf32>
    %c0_25 = arith.constant 0 : index
    %c0_26 = arith.constant 0 : index
    %56 = vector.load %arg6[%c0_25, %c0_26] : memref<256x32xf32, #tpu.memory_space<vmem>>, vector<256x32xf32>
    %cst_27 = arith.constant dense<0.000000e+00> : vector<8x32xf32>
    %57 = tpu.matmul %55, %56, %cst_27 {dimension_numbers = #tpu.dot_dimension_numbers<[1], [0], [0], [1], [0, 0, 1, 1], [], []>} : vector<8x256xf32>, vector<256x32xf32>, vector<8x32xf32> -> vector<8x32xf32>
    %c72 = arith.constant 72 : index
    %c0_28 = arith.constant 0 : index
    %58 = vector.load %arg5[%c72, %c0_28] : memref<168x128xf32, #tpu.memory_space<vmem>>, vector<24x8xf32>
    %cst_29 = arith.constant dense<0.000000e+00> : vector<24x32xf32>
    %59 = tpu.matmul %58, %57, %cst_29 {dimension_numbers = #tpu.dot_dimension_numbers<[1], [0], [0], [1], [0, 0, 1, 1], [], []>} : vector<24x8xf32>, vector<8x32xf32>, vector<24x32xf32> -> vector<24x32xf32>
    %c96 = arith.constant 96 : index
    %c0_30 = arith.constant 0 : index
    %60 = vector.load %arg5[%c96, %c0_30] : memref<168x128xf32, #tpu.memory_space<vmem>>, vector<24x1xf32>
    %61 = vector.broadcast %60 : vector<24x1xf32> to vector<24x32xf32>
    %62 = arith.addf %59, %61 : vector<24x32xf32>
    %cst_31 = arith.constant 0.000000e+00 : f32
    %63 = vector.broadcast %cst_31 : f32 to vector<24x32xf32>
    %64 = arith.maximumf %62, %63 : vector<24x32xf32>
    %c120 = arith.constant 120 : index
    %c0_32 = arith.constant 0 : index
    %65 = vector.load %arg5[%c120, %c0_32] : memref<168x128xf32, #tpu.memory_space<vmem>>, vector<16x24xf32>
    %cst_33 = arith.constant dense<0.000000e+00> : vector<16x32xf32>
    %66 = tpu.matmul %65, %64, %cst_33 {dimension_numbers = #tpu.dot_dimension_numbers<[1], [0], [0], [1], [0, 0, 1, 1], [], []>} : vector<16x24xf32>, vector<24x32xf32>, vector<16x32xf32> -> vector<16x32xf32>
    %c136 = arith.constant 136 : index
    %c0_34 = arith.constant 0 : index
    %67 = vector.load %arg5[%c136, %c0_34] : memref<168x128xf32, #tpu.memory_space<vmem>>, vector<16x1xf32>
    %68 = vector.broadcast %67 : vector<16x1xf32> to vector<16x32xf32>
    %69 = arith.addf %66, %68 : vector<16x32xf32>
    %cst_35 = arith.constant 0.000000e+00 : f32
    %70 = vector.broadcast %cst_35 : f32 to vector<16x32xf32>
    %71 = arith.maximumf %69, %70 : vector<16x32xf32>
    %c152 = arith.constant 152 : index
    %c0_36 = arith.constant 0 : index
    %72 = vector.load %arg5[%c152, %c0_36] : memref<168x128xf32, #tpu.memory_space<vmem>>, vector<8x16xf32>
    %cst_37 = arith.constant dense<0.000000e+00> : vector<8x32xf32>
    %73 = tpu.matmul %72, %71, %cst_37 {dimension_numbers = #tpu.dot_dimension_numbers<[1], [0], [0], [1], [0, 0, 1, 1], [], []>} : vector<8x16xf32>, vector<16x32xf32>, vector<8x32xf32> -> vector<8x32xf32>
    %c160 = arith.constant 160 : index
    %c0_38 = arith.constant 0 : index
    %74 = vector.load %arg5[%c160, %c0_38] : memref<168x128xf32, #tpu.memory_space<vmem>>, vector<8x1xf32>
    %75 = vector.broadcast %74 : vector<8x1xf32> to vector<8x32xf32>
    %76 = arith.addf %73, %75 : vector<8x32xf32>
    %77 = vector.extract_strided_slice %76 {offsets = [0, 0], sizes = [1, 32], strides = [1, 1]} : vector<8x32xf32> to vector<1x32xf32>
    %78 = arith.negf %77 : vector<1x32xf32>
    %79 = math.exp %78 : vector<1x32xf32>
    %cst_39 = arith.constant 1.000000e+00 : f32
    %80 = vector.broadcast %cst_39 : f32 to vector<1x32xf32>
    %81 = arith.addf %80, %79 : vector<1x32xf32>
    %82 = arith.divf %80, %81 : vector<1x32xf32>
    %c0_40 = arith.constant 0 : index
    %c0_41 = arith.constant 0 : index
    %c0_42 = arith.constant 0 : index
    %83 = vector.load %arg7[%c0_40, %c0_41, %c0_42] : memref<1x1x32xf32, #tpu.memory_space<vmem>>, vector<1x1x32xf32>
    %84 = vector.shape_cast %83 : vector<1x1x32xf32> to vector<1x32xf32>
    %85 = vector.shape_cast %82 : vector<1x32xf32> to vector<1x1x32xf32>
    tpu.vector_store %arg7[%c0_40, %c0_41, %c0_42], %85 {strides = array<i32>} : memref<1x1x32xf32, #tpu.memory_space<vmem>>, vector<1x1x32xf32>,
    return
  }
  func.func @transform_0(%arg0: i32) -> (i32, i32, i32) {
    %c0_i32 = arith.constant 0 : i32
    %c0_i32_0 = arith.constant 0 : i32
    %c0_i32_1 = arith.constant 0 : i32
    return %arg0, %c0_i32, %c0_i32_0 : i32, i32, i32
  }
  func.func @transform_1(%arg0: i32) -> (i32, i32, i32) {
    %c0_i32 = arith.constant 0 : i32
    %c0_i32_0 = arith.constant 0 : i32
    %c0_i32_1 = arith.constant 0 : i32
    return %arg0, %c0_i32, %c0_i32_0 : i32, i32, i32
  }
  func.func @transform_2(%arg0: i32) -> (i32, i32, i32) {
    %c0_i32 = arith.constant 0 : i32
    %c0_i32_0 = arith.constant 0 : i32
    %c0_i32_1 = arith.constant 0 : i32
    return %arg0, %c0_i32, %c0_i32_0 : i32, i32, i32
  }
  func.func @transform_3(%arg0: i32) -> (i32, i32, i32) {
    %c0_i32 = arith.constant 0 : i32
    %c0_i32_0 = arith.constant 0 : i32
    %c0_i32_1 = arith.constant 0 : i32
    return %arg0, %c0_i32, %c0_i32_0 : i32, i32, i32
  }
  func.func @transform_4(%arg0: i32) -> (i32, i32) {
    %c0_i32 = arith.constant 0 : i32
    %c0_i32_0 = arith.constant 0 : i32
    %c0_i32_1 = arith.constant 0 : i32
    return %c0_i32, %c0_i32_0 : i32, i32
  }
  func.func @transform_5(%arg0: i32) -> (i32, i32) {
    %c0_i32 = arith.constant 0 : i32
    %c0_i32_0 = arith.constant 0 : i32
    %c0_i32_1 = arith.constant 0 : i32
    return %c0_i32, %c0_i32_0 : i32, i32
  }
  func.func @transform_6(%arg0: i32) -> (i32, i32, i32) {
    %c0_i32 = arith.constant 0 : i32
    %c0_i32_0 = arith.constant 0 : i32
    %c0_i32_1 = arith.constant 0 : i32
    return %arg0, %c0_i32, %c0_i32_0 : i32, i32, i32
  }
}

</mosaic_0001>

<llo_original>
// kernel: tpu_custom_call.1
$region0: #{tpu_custom_call.1}
  #allocation0 [shape = 'u32[]', space=smem, size = 0x4, offset = 0x4, fixed_abs, tag = 'smem constant byte address 0x4 - core index']
  #allocation1 [shape = 'u32[72,128]{1,0:T(1,128)}', space=vmem, size = 0x9000, scoped, tag = 'internal scratch']
  %s0 = inlined_call_operand.vmem [shape: f32[2,24,256], index: 0, kind: input, shape index: {}]
  %s1 = inlined_call_operand.hbm [shape: bf16[2,256,512], index: 1, kind: input, shape index: {}]
  %s2 = inlined_call_operand.hbm [shape: bf16[2,512,256], index: 2, kind: input, shape index: {}]
  %s3 = inlined_call_operand.vmem [shape: f32[2,4,512], index: 3, kind: input, shape index: {}]
  %s4 = inlined_call_operand.vmem [shape: f32[168,128], index: 4, kind: input, shape index: {}]
  %s5 = inlined_call_operand.vmem [shape: f32[256,32], index: 5, kind: input, shape index: {}]
  %s6 = inlined_call_operand.hbm [shape: f32[2,1,32], index: 6, kind: output, shape index: {}]
  %s7 = sld [smem:[#allocation0]]
  $region65: #{tpu_custom_call.1} parent=0
    _
  %s9 = ssub.s32 1, %s7
  %s10 = scalar_select 0, %s9, %s7
  $region1: #{tpu_custom_call.1} parent=0
    #allocation2 [shape = 'u8[524288]{0}', space=vmem, size = 0x80000, scoped, tag = 'input window, operand 1']
    #allocation3 [shape = 's32[2]{0}', space=sflag, size = 0x8, scoped, tag = 'scoped memory for tpu_custom_call.1']
    #allocation4 [shape = 's32[2]{0}', space=sflag, size = 0x8, scoped, tag = 'scoped memory for tpu_custom_call.1']
    #allocation5 [shape = 'u8[524288]{0}', space=vmem, size = 0x80000, scoped, tag = 'input window, operand 2']
    #allocation6 [shape = 's32[2]{0}', space=sflag, size = 0x8, scoped, tag = 'scoped memory for tpu_custom_call.1']
    #allocation7 [shape = 'u8[1024]{0}', space=vmem, size = 0x400, scoped, tag = 'output window, operand 0']
    %11 = vsyncpa [#allocation3], 0
    %s12 = scalar_lea.sflag [#allocation3], 1
    %13 = vsyncpa %s12, 0
    %14 = vsyncpa [#allocation6], 0
    %s15 = scalar_lea.sflag [#allocation6], 1
    %16 = vsyncpa %s15, 0
    %17 = vsyncpa [#allocation4], 0
    %s18 = scalar_lea.sflag [#allocation4], 1
    %19 = vsyncpa %s18, 0
    loop: start=0, step=1, limit=4
    $region2: #{tpu_custom_call.1} parent=1 // loop_pre_header
      _
    $region3: #{tpu_custom_call.1} parent=1 // loop_header
      %s21 = sphi 0, %s25
      %p22 = scmp.ge.s32.totalorder %s21, 4
      %s31 = sphi 0, %s33
      %s34 = sphi 0, %s31
      %s35 = sphi 0, %s34
      %s51 = sphi 0, %s35
      %s57 = sphi 0, %s59
      %s60 = sphi 0, %s57
      %s61 = sphi 0, %s60
      %s77 = sphi 0, %s61
      %s83 = sphi 0, %s85
      %s86 = sphi 0, %s83
      %s87 = sphi 0, %s86
      %s103 = sphi 0, %s87
      %s109 = sphi 0, %s111
      %s112 = sphi 0, %s109
      %s113 = sphi 0, %s112
      %s129 = sphi 0, %s113
      %s133 = sphi 0, %s133
      %s135 = sphi 0, %s133
      %s136 = sphi 0, %s135
      %s150 = sphi 0, %s136
      %s154 = sphi 0, %s154
      %s156 = sphi 0, %s154
      %s157 = sphi 0, %s156
      %s171 = sphi 0, %s157
      %s177 = sphi 0, %s179
      %s180 = sphi 0, %s177
      %s181 = sphi 0, %s180
      %s197 = sphi 0, %s181
    $region4: #{tpu_custom_call.1} parent=1 // loop_header_branch
      %24 = sbr.rel (%p22) target = $region8
    $region5: #{tpu_custom_call.1} parent=1 // loop_body
      %s26 = ssub.s32 %s21, 1
      %s27 = ssub.s32 %s21, 2
      %s28 = sadd.s32 %s21, 1
      %s29 = ssub.s32 %s21, %s28
      %p30 = scmp.eq.s32.totalorder %s29, 0
      %s32 = sadd.s32 %s31, 1
      %s33 = scalar_select %p30, %s31, %s32
      %p36 = pneg %p30
      %p37 = scmp.eq.s32.totalorder %s21, 1
      %p38 = por %p36, %p37
      %p39 = scmp.ne.s32.totalorder %s31, %s34
      %p40 = scmp.eq.s32.totalorder %s21, 0
      %p41 = por %p39, %p40
      %p42 = scmp.ne.s32.totalorder %s31, %s34
      %p43 = scmp.eq.s32.totalorder %s26, 1
      %p44 = por %p42, %p43
      %p45 = scmp.ne.s32.totalorder %s34, %s35
      %p46 = scmp.eq.s32.totalorder %s26, 0
      %p47 = por %p45, %p46
      %p48 = scmp.ne.s32.totalorder %s34, %s35
      %p49 = scmp.eq.s32.totalorder %s27, 1
      %p50 = por %p48, %p49
      %p52 = scmp.ne.s32.totalorder %s35, %s51
      %p53 = scmp.eq.s32.totalorder %s27, 0
      %p54 = por %p52, %p53
      %s55 = ssub.s32 %s21, %s28
      %p56 = scmp.eq.s32.totalorder %s55, 0
      %s58 = sadd.s32 %s57, 1
      %s59 = scalar_select %p56, %s57, %s58
      %p62 = pneg %p56
      %p63 = scmp.eq.s32.totalorder %s21, 1
      %p64 = por %p62, %p63
      %p65 = scmp.ne.s32.totalorder %s57, %s60
      %p66 = scmp.eq.s32.totalorder %s21, 0
      %p67 = por %p65, %p66
      %p68 = scmp.ne.s32.totalorder %s57, %s60
      %p69 = scmp.eq.s32.totalorder %s26, 1
      %p70 = por %p68, %p69
      %p71 = scmp.ne.s32.totalorder %s60, %s61
      %p72 = scmp.eq.s32.totalorder %s26, 0
      %p73 = por %p71, %p72
      %p74 = scmp.ne.s32.totalorder %s60, %s61
      %p75 = scmp.eq.s32.totalorder %s27, 1
      %p76 = por %p74, %p75
      %p78 = scmp.ne.s32.totalorder %s61, %s77
      %p79 = scmp.eq.s32.totalorder %s27, 0
      %p80 = por %p78, %p79
      %s81 = ssub.s32 %s21, %s28
      %p82 = scmp.eq.s32.totalorder %s81, 0
      %s84 = sadd.s32 %s83, 1
      %s85 = scalar_select %p82, %s83, %s84
      %p88 = pneg %p82
      %p89 = scmp.eq.s32.totalorder %s21, 1
      %p90 = por %p88, %p89
      %p91 = scmp.ne.s32.totalorder %s83, %s86
      %p92 = scmp.eq.s32.totalorder %s21, 0
      %p93 = por %p91, %p92
      %p94 = scmp.ne.s32.totalorder %s83, %s86
      %p95 = scmp.eq.s32.totalorder %s26, 1
      %p96 = por %p94, %p95
      %p97 = scmp.ne.s32.totalorder %s86, %s87
      %p98 = scmp.eq.s32.totalorder %s26, 0
      %p99 = por %p97, %p98
      %p100 = scmp.ne.s32.totalorder %s86, %s87
      %p101 = scmp.eq.s32.totalorder %s27, 1
      %p102 = por %p100, %p101
      %p104 = scmp.ne.s32.totalorder %s87, %s103
      %p105 = scmp.eq.s32.totalorder %s27, 0
      %p106 = por %p104, %p105
      %s107 = ssub.s32 %s21, %s28
      %p108 = scmp.eq.s32.totalorder %s107, 0
      %s110 = sadd.s32 %s109, 1
      %s111 = scalar_select %p108, %s109, %s110
      %p114 = pneg %p108
      %p115 = scmp.eq.s32.totalorder %s21, 1
      %p116 = por %p114, %p115
      %p117 = scmp.ne.s32.totalorder %s109, %s112
      %p118 = scmp.eq.s32.totalorder %s21, 0
      %p119 = por %p117, %p118
      %p120 = scmp.ne.s32.totalorder %s109, %s112
      %p121 = scmp.eq.s32.totalorder %s26, 1
      %p122 = por %p120, %p121
      %p123 = scmp.ne.s32.totalorder %s112, %s113
      %p124 = scmp.eq.s32.totalorder %s26, 0
      %p125 = por %p123, %p124
      %p126 = scmp.ne.s32.totalorder %s112, %s113
      %p127 = scmp.eq.s32.totalorder %s27, 1
      %p128 = por %p126, %p127
      %p130 = scmp.ne.s32.totalorder %s113, %s129
      %p131 = scmp.eq.s32.totalorder %s27, 0
      %p132 = por %p130, %p131
      %s134 = sadd.s32 %s133, 1
      %p137 = scmp.eq.s32.totalorder %s21, 1
      %p138 = scmp.ne.s32.totalorder %s133, %s135
      %p139 = scmp.eq.s32.totalorder %s21, 0
      %p140 = por %p138, %p139
      %p141 = scmp.ne.s32.totalorder %s133, %s135
      %p142 = scmp.eq.s32.totalorder %s26, 1
      %p143 = por %p141, %p142
      %p144 = scmp.ne.s32.totalorder %s135, %s136
      %p145 = scmp.eq.s32.totalorder %s26, 0
      %p146 = por %p144, %p145
      %p147 = scmp.ne.s32.totalorder %s135, %s136
      %p148 = scmp.eq.s32.totalorder %s27, 1
      %p149 = por %p147, %p148
      %p151 = scmp.ne.s32.totalorder %s136, %s150
      %p152 = scmp.eq.s32.totalorder %s27, 0
      %p153 = por %p151, %p152
      %s155 = sadd.s32 %s154, 1
      %p158 = scmp.eq.s32.totalorder %s21, 1
      %p159 = scmp.ne.s32.totalorder %s154, %s156
      %p160 = scmp.eq.s32.totalorder %s21, 0
      %p161 = por %p159, %p160
      %p162 = scmp.ne.s32.totalorder %s154, %s156
      %p163 = scmp.eq.s32.totalorder %s26, 1
      %p164 = por %p162, %p163
      %p165 = scmp.ne.s32.totalorder %s156, %s157
      %p166 = scmp.eq.s32.totalorder %s26, 0
      %p167 = por %p165, %p166
      %p168 = scmp.ne.s32.totalorder %s156, %s157
      %p169 = scmp.eq.s32.totalorder %s27, 1
      %p170 = por %p168, %p169
      %p172 = scmp.ne.s32.totalorder %s157, %s171
      %p173 = scmp.eq.s32.totalorder %s27, 0
      %p174 = por %p172, %p173
      %s175 = ssub.s32 %s21, %s28
      %p176 = scmp.eq.s32.totalorder %s175, 0
      %s178 = sadd.s32 %s177, 1
      %s179 = scalar_select %p176, %s177, %s178
      %p182 = pneg %p176
      %p183 = scmp.eq.s32.totalorder %s21, 1
      %p184 = por %p182, %p183
      %p185 = scmp.ne.s32.totalorder %s177, %s180
      %p186 = scmp.eq.s32.totalorder %s21, 0
      %p187 = por %p185, %p186
      %p188 = scmp.ne.s32.totalorder %s177, %s180
      %p189 = scmp.eq.s32.totalorder %s26, 1
      %p190 = por %p188, %p189
      %p191 = scmp.ne.s32.totalorder %s180, %s181
      %p192 = scmp.eq.s32.totalorder %s26, 0
      %p193 = por %p191, %p192
      %p194 = scmp.ne.s32.totalorder %s180, %s181
      %p195 = scmp.eq.s32.totalorder %s27, 1
      %p196 = por %p194, %p195
      %p198 = scmp.ne.s32.totalorder %s181, %s197
      %p199 = scmp.eq.s32.totalorder %s27, 0
      %p200 = por %p198, %p199
      %p201 = scmp.le.s32.totalorder 1, %s21
      %p202 = scmp.lt.s32.totalorder %s21, 3
      %p203 = pnand %p201, %p202
      %p204 = pneg %p203
      // Predicated region
      $region9: #{tpu_custom_call.1} parent=5 // pred_check
        _
      $region10: #{tpu_custom_call.1} parent=5 // pred_check_branch
        %206 = sbr.rel (%p203) target = $region12
      $region11: #{tpu_custom_call.1} parent=5 // pred_region
        %s207 = ssub.s32 %s21, 1
        // Predicated region
        $region13: #{tpu_custom_call.1} parent=11 // pred_check
          %p208 = pneg %p146
        $region14: #{tpu_custom_call.1} parent=11 // pred_check_branch
          %210 = sbr.rel (%p208) target = $region16
        $region15: #{tpu_custom_call.1} parent=11 // pred_region
          _
        $region16: #{tpu_custom_call.1} parent=11 // pred_fallthru
          _
        // Predicated region
        $region17: #{tpu_custom_call.1} parent=11 // pred_check
          %p211 = pneg %p167
        $region18: #{tpu_custom_call.1} parent=11 // pred_check_branch
          %213 = sbr.rel (%p211) target = $region20
        $region19: #{tpu_custom_call.1} parent=11 // pred_region
          _
        $region20: #{tpu_custom_call.1} parent=11 // pred_fallthru
          _
      $region12: #{tpu_custom_call.1} parent=5 // pred_fallthru
        _
      %p214 = scmp.lt.s32.totalorder %s21, 2
      // Predicated region
      $region21: #{tpu_custom_call.1} parent=5 // pred_check
        %p215 = pneg %p214
      $region22: #{tpu_custom_call.1} parent=5 // pred_check_branch
        %217 = sbr.rel (%p215) target = $region24
      $region23: #{tpu_custom_call.1} parent=5 // pred_region
        // Predicated region
        $region25: #{tpu_custom_call.1} parent=23 // pred_check
          %p218 = pneg %p41
        $region26: #{tpu_custom_call.1} parent=23 // pred_check_branch
          %220 = sbr.rel (%p218) target = $region28
        $region27: #{tpu_custom_call.1} parent=23 // pred_region
          %p221 = scmp.lt.s32.totalorder %s21, 1
          %s222 = scalar_select %p221, %s21, 1
          %s223 = smul.addr %s222, 6
          %s224 = smul.addr %s223, 8
          %s225 = scalar_lea.vmem %s0, %s224
        $region28: #{tpu_custom_call.1} parent=23 // pred_fallthru
          _
        // Predicated region
        $region29: #{tpu_custom_call.1} parent=23 // pred_check
          %p226 = pneg %p67
        $region30: #{tpu_custom_call.1} parent=23 // pred_check_branch
          %228 = sbr.rel (%p226) target = $region32
        $region31: #{tpu_custom_call.1} parent=23 // pred_region
          %s229 = sand.u32 %s57, 1
          %s230 = scalar_lea.sflag [#allocation3], %s229
          %s231 = sand.u32 %s57, 1
          %s232 = smul.addr %s231, 512
          %s233 = scalar_lea.vmem [#allocation2], %s232
          %235 = vsyncadd %s230, 0
          %s236 = smul.addr %s21, 128
          %s237 = smul.addr %s236, 4
          %s238 = scalar_lea.hbm %s1, %s237
          %s239 = sshll.u32 %s238, 4
          %s240 = int_to_ptr.hbm [resolvable:$true] %s239
          %s241 = sshll.u32 %s233, 4
          %s242 = int_to_ptr.vmem [resolvable:$true] %s241
          %247 = dma.hbm_to_vmem [thread:$0]  %s240, 8192, %s242, %s230, 256, 256, 16
        $region32: #{tpu_custom_call.1} parent=23 // pred_fallthru
          _
        // Predicated region
        $region33: #{tpu_custom_call.1} parent=23 // pred_check
          %p248 = pneg %p93
        $region34: #{tpu_custom_call.1} parent=23 // pred_check_branch
          %250 = sbr.rel (%p248) target = $region36
        $region35: #{tpu_custom_call.1} parent=23 // pred_region
          %s251 = sand.u32 %s83, 1
          %s252 = scalar_lea.sflag [#allocation6], %s251
          %s253 = sand.u32 %s83, 1
          %s254 = smul.addr %s253, 512
          %s255 = scalar_lea.vmem [#allocation5], %s254
          %257 = vsyncadd %s252, 0
          %s258 = smul.addr %s21, 128
          %s259 = smul.addr %s258, 4
          %s260 = scalar_lea.hbm %s2, %s259
          %s261 = sshll.u32 %s260, 4
          %s262 = int_to_ptr.hbm [resolvable:$true] %s261
          %s263 = sshll.u32 %s255, 4
          %s264 = int_to_ptr.vmem [resolvable:$true] %s263
          %269 = dma.hbm_to_vmem [thread:$0]  %s262, 8192, %s264, %s252, 128, 128, 8
        $region36: #{tpu_custom_call.1} parent=23 // pred_fallthru
          _
        // Predicated region
        $region37: #{tpu_custom_call.1} parent=23 // pred_check
          %p270 = pneg %p119
        $region38: #{tpu_custom_call.1} parent=23 // pred_check_branch
          %272 = sbr.rel (%p270) target = $region40
        $region39: #{tpu_custom_call.1} parent=23 // pred_region
          %p273 = scmp.lt.s32.totalorder %s21, 1
          %s274 = scalar_select %p273, %s21, 1
          %s275 = smul.addr %s274, 4
          %s276 = smul.addr %s275, 4
          %s277 = scalar_lea.vmem %s3, %s276
        $region40: #{tpu_custom_call.1} parent=23 // pred_fallthru
          _
      $region24: #{tpu_custom_call.1} parent=5 // pred_fallthru
        _
      %p278 = scmp.le.s32.totalorder 1, %s21
      %p279 = scmp.lt.s32.totalorder %s21, 3
      %p280 = pnand %p278, %p279
      %p281 = pneg %p280
      // Predicated region
      $region41: #{tpu_custom_call.1} parent=5 // pred_check
        _
      $region42: #{tpu_custom_call.1} parent=5 // pred_check_branch
        %283 = sbr.rel (%p280) target = $region44
      $region43: #{tpu_custom_call.1} parent=5 // pred_region
        %s284 = ssub.s32 %s21, 1
        %s285 = sand.u32 %s60, 1
        %s286 = scalar_lea.sflag [#allocation3], %s285
        %s287 = sand.u32 %s60, 1
        %s288 = smul.addr %s287, 512
        %s289 = scalar_lea.vmem [#allocation2], %s288
        // Predicated region
        $region45: #{tpu_custom_call.1} parent=43 // pred_check
          %p290 = pneg %p73
        $region46: #{tpu_custom_call.1} parent=43 // pred_check_branch
          %292 = sbr.rel (%p290) target = $region48
        $region47: #{tpu_custom_call.1} parent=43 // pred_region
          %294 = dma.done %s286, 8192
        $region48: #{tpu_custom_call.1} parent=43 // pred_fallthru
          _
        %s295 = sand.u32 %s86, 1
        %s296 = scalar_lea.sflag [#allocation6], %s295
        %s297 = sand.u32 %s86, 1
        %s298 = smul.addr %s297, 512
        %s299 = scalar_lea.vmem [#allocation5], %s298
        // Predicated region
        $region49: #{tpu_custom_call.1} parent=43 // pred_check
          %p300 = pneg %p99
        $region50: #{tpu_custom_call.1} parent=43 // pred_check_branch
          %302 = sbr.rel (%p300) target = $region52
        $region51: #{tpu_custom_call.1} parent=43 // pred_region
          %304 = dma.done %s296, 8192
        $region52: #{tpu_custom_call.1} parent=43 // pred_fallthru
          _
        %p305 = scmp.lt.s32.totalorder %s26, 1
        %s306 = scalar_select %p305, %s26, 1
        %s307 = smul.addr %s306, 6
        %s308 = smul.addr %s307, 8
        %s309 = scalar_lea.vmem %s0, %s308
        %p310 = pneg %p47
        %p311 = pneg %p44
        %s312 = sand.u32 %s60, 1
        %s313 = scalar_lea.sflag [#allocation3], %s312
        %s314 = sand.u32 %s60, 1
        %s315 = smul.addr %s314, 512
        %s316 = scalar_lea.vmem [#allocation2], %s315
        %p317 = pneg %p73
        %p318 = pneg %p70
        %s319 = sand.u32 %s86, 1
        %s320 = scalar_lea.sflag [#allocation6], %s319
        %s321 = sand.u32 %s86, 1
        %s322 = smul.addr %s321, 512
        %s323 = scalar_lea.vmem [#allocation5], %s322
        %p324 = pneg %p99
        %p325 = pneg %p96
        %p326 = scmp.lt.s32.totalorder %s26, 1
        %s327 = scalar_select %p326, %s26, 1
        %s328 = smul.addr %s327, 4
        %s329 = smul.addr %s328, 4
        %s330 = scalar_lea.vmem %s3, %s329
        %p331 = pneg %p125
        %p332 = pneg %p122
        %p333 = pneg %p146
        %p334 = pneg %p143
        %p335 = pneg %p167
        %p336 = pneg %p164
        %p337 = pneg %p193
        %p338 = pneg %p190
        %s339 = sand.u32 %s180, 1
        %s340 = scalar_lea.sflag [#allocation4], %s339
        %s341 = sand.u32 %s180, 1
        %s342 = scalar_lea.vmem [#allocation7], %s341
        %p343 = scmp.lt.s32.totalorder %s26, 1
        %s344 = scalar_select %p343, %s26, 1
        %s345 = smul.addr %s344, 6
        %s346 = smul.addr %s345, 8
        %s347 = scalar_lea.vmem %s0, %s346
        %p348 = scmp.lt.s32.totalorder %s26, 1
        %s349 = scalar_select %p348, %s26, 1
        %s350 = smul.addr %s349, 4
        %s351 = smul.addr %s350, 4
        %s352 = scalar_lea.vmem %s3, %s351
        %v353 = vld [vmem:[%s289] sm:$0xff]
        %v354 = vld [vmem:[%s289 + $0x8] sm:$0xff]
        %v355 = vld [vmem:[%s289 + $0x10] sm:$0xff]
        %v356 = vld [vmem:[%s289 + $0x18] sm:$0xff]
        %v357 = vld [vmem:[%s289 + $0x20] sm:$0xff]
        %v358 = vld [vmem:[%s289 + $0x28] sm:$0xff]
        %v359 = vld [vmem:[%s289 + $0x30] sm:$0xff]
        %v360 = vld [vmem:[%s289 + $0x38] sm:$0xff]
        %v361 = vld [vmem:[%s289 + $0x40] sm:$0xff]
        %v362 = vld [vmem:[%s289 + $0x48] sm:$0xff]
        %v363 = vld [vmem:[%s289 + $0x50] sm:$0xff]
        %v364 = vld [vmem:[%s289 + $0x58] sm:$0xff]
        %v365 = vld [vmem:[%s289 + $0x60] sm:$0xff]
        %v366 = vld [vmem:[%s289 + $0x68] sm:$0xff]
        %v367 = vld [vmem:[%s289 + $0x70] sm:$0xff]
        %v368 = vld [vmem:[%s289 + $0x78] sm:$0xff]
        %v369 = vld [vmem:[%s289 + $0x80] sm:$0xff]
        %v370 = vld [vmem:[%s289 + $0x88] sm:$0xff]
        %v371 = vld [vmem:[%s289 + $0x90] sm:$0xff]
        %v372 = vld [vmem:[%s289 + $0x98] sm:$0xff]
        %v373 = vld [vmem:[%s289 + $0xa0] sm:$0xff]
        %v374 = vld [vmem:[%s289 + $0xa8] sm:$0xff]
        %v375 = vld [vmem:[%s289 + $0xb0] sm:$0xff]
        %v376 = vld [vmem:[%s289 + $0xb8] sm:$0xff]
        %v377 = vld [vmem:[%s289 + $0xc0] sm:$0xff]
        %v378 = vld [vmem:[%s289 + $0xc8] sm:$0xff]
        %v379 = vld [vmem:[%s289 + $0xd0] sm:$0xff]
        %v380 = vld [vmem:[%s289 + $0xd8] sm:$0xff]
        %v381 = vld [vmem:[%s289 + $0xe0] sm:$0xff]
        %v382 = vld [vmem:[%s289 + $0xe8] sm:$0xff]
        %v383 = vld [vmem:[%s289 + $0xf0] sm:$0xff]
        %v384 = vld [vmem:[%s289 + $0xf8] sm:$0xff]
        %v385 = vld [vmem:[%s289 + $0x100] sm:$0xff]
        %v386 = vld [vmem:[%s289 + $0x108] sm:$0xff]
        %v387 = vld [vmem:[%s289 + $0x110] sm:$0xff]
        %v388 = vld [vmem:[%s289 + $0x118] sm:$0xff]
        %v389 = vld [vmem:[%s289 + $0x120] sm:$0xff]
        %v390 = vld [vmem:[%s289 + $0x128] sm:$0xff]
        %v391 = vld [vmem:[%s289 + $0x130] sm:$0xff]
        %v392 = vld [vmem:[%s289 + $0x138] sm:$0xff]
        %v393 = vld [vmem:[%s289 + $0x140] sm:$0xff]
        %v394 = vld [vmem:[%s289 + $0x148] sm:$0xff]
        %v395 = vld [vmem:[%s289 + $0x150] sm:$0xff]
        %v396 = vld [vmem:[%s289 + $0x158] sm:$0xff]
        %v397 = vld [vmem:[%s289 + $0x160] sm:$0xff]
        %v398 = vld [vmem:[%s289 + $0x168] sm:$0xff]
        %v399 = vld [vmem:[%s289 + $0x170] sm:$0xff]
        %v400 = vld [vmem:[%s289 + $0x178] sm:$0xff]
        %v401 = vld [vmem:[%s289 + $0x180] sm:$0xff]
        %v402 = vld [vmem:[%s289 + $0x188] sm:$0xff]
        %v403 = vld [vmem:[%s289 + $0x190] sm:$0xff]
        %v404 = vld [vmem:[%s289 + $0x198] sm:$0xff]
        %v405 = vld [vmem:[%s289 + $0x1a0] sm:$0xff]
        %v406 = vld [vmem:[%s289 + $0x1a8] sm:$0xff]
        %v407 = vld [vmem:[%s289 + $0x1b0] sm:$0xff]
        %v408 = vld [vmem:[%s289 + $0x1b8] sm:$0xff]
        %v409 = vld [vmem:[%s289 + $0x1c0] sm:$0xff]
        %v410 = vld [vmem:[%s289 + $0x1c8] sm:$0xff]
        %v411 = vld [vmem:[%s289 + $0x1d0] sm:$0xff]
        %v412 = vld [vmem:[%s289 + $0x1d8] sm:$0xff]
        %v413 = vld [vmem:[%s289 + $0x1e0] sm:$0xff]
        %v414 = vld [vmem:[%s289 + $0x1e8] sm:$0xff]
        %v415 = vld [vmem:[%s289 + $0x1f0] sm:$0xff]
        %v416 = vld [vmem:[%s289 + $0x1f8] sm:$0xff]
        %v417 = vunpack.c.l.bf16 %v353
        %v418 = vunpack.c.h.bf16 %v353
        %v419 = vunpack.c.l.bf16 %v354
        %v420 = vunpack.c.h.bf16 %v354
        %v421 = vunpack.c.l.bf16 %v355
        %v422 = vunpack.c.h.bf16 %v355
        %v423 = vunpack.c.l.bf16 %v356
        %v424 = vunpack.c.h.bf16 %v356
        %v425 = vunpack.c.l.bf16 %v357
        %v426 = vunpack.c.h.bf16 %v357
        %v427 = vunpack.c.l.bf16 %v358
        %v428 = vunpack.c.h.bf16 %v358
        %v429 = vunpack.c.l.bf16 %v359
        %v430 = vunpack.c.h.bf16 %v359
        %v431 = vunpack.c.l.bf16 %v360
        %v432 = vunpack.c.h.bf16 %v360
        %v433 = vunpack.c.l.bf16 %v361
        %v434 = vunpack.c.h.bf16 %v361
        %v435 = vunpack.c.l.bf16 %v362
        %v436 = vunpack.c.h.bf16 %v362
        %v437 = vunpack.c.l.bf16 %v363
        %v438 = vunpack.c.h.bf16 %v363
        %v439 = vunpack.c.l.bf16 %v364
        %v440 = vunpack.c.h.bf16 %v364
        %v441 = vunpack.c.l.bf16 %v365
        %v442 = vunpack.c.h.bf16 %v365
        %v443 = vunpack.c.l.bf16 %v366
        %v444 = vunpack.c.h.bf16 %v366
        %v445 = vunpack.c.l.bf16 %v367
        %v446 = vunpack.c.h.bf16 %v367
        %v447 = vunpack.c.l.bf16 %v368
        %v448 = vunpack.c.h.bf16 %v368
        %v449 = vunpack.c.l.bf16 %v369
        %v450 = vunpack.c.h.bf16 %v369
        %v451 = vunpack.c.l.bf16 %v370
        %v452 = vunpack.c.h.bf16 %v370
        %v453 = vunpack.c.l.bf16 %v371
        %v454 = vunpack.c.h.bf16 %v371
        %v455 = vunpack.c.l.bf16 %v372
        %v456 = vunpack.c.h.bf16 %v372
        %v457 = vunpack.c.l.bf16 %v373
        %v458 = vunpack.c.h.bf16 %v373
        %v459 = vunpack.c.l.bf16 %v374
        %v460 = vunpack.c.h.bf16 %v374
        %v461 = vunpack.c.l.bf16 %v375
        %v462 = vunpack.c.h.bf16 %v375
        %v463 = vunpack.c.l.bf16 %v376
        %v464 = vunpack.c.h.bf16 %v376
        %v465 = vunpack.c.l.bf16 %v377
        %v466 = vunpack.c.h.bf16 %v377
        %v467 = vunpack.c.l.bf16 %v378
        %v468 = vunpack.c.h.bf16 %v378
        %v469 = vunpack.c.l.bf16 %v379
        %v470 = vunpack.c.h.bf16 %v379
        %v471 = vunpack.c.l.bf16 %v380
        %v472 = vunpack.c.h.bf16 %v380
        %v473 = vunpack.c.l.bf16 %v381
        %v474 = vunpack.c.h.bf16 %v381
        %v475 = vunpack.c.l.bf16 %v382
        %v476 = vunpack.c.h.bf16 %v382
        %v477 = vunpack.c.l.bf16 %v383
        %v478 = vunpack.c.h.bf16 %v383
        %v479 = vunpack.c.l.bf16 %v384
        %v480 = vunpack.c.h.bf16 %v384
        %v481 = vunpack.c.l.bf16 %v385
        %v482 = vunpack.c.h.bf16 %v385
        %v483 = vunpack.c.l.bf16 %v386
        %v484 = vunpack.c.h.bf16 %v386
        %v485 = vunpack.c.l.bf16 %v387
        %v486 = vunpack.c.h.bf16 %v387
        %v487 = vunpack.c.l.bf16 %v388
        %v488 = vunpack.c.h.bf16 %v388
        %v489 = vunpack.c.l.bf16 %v389
        %v490 = vunpack.c.h.bf16 %v389
        %v491 = vunpack.c.l.bf16 %v390
        %v492 = vunpack.c.h.bf16 %v390
        %v493 = vunpack.c.l.bf16 %v391
        %v494 = vunpack.c.h.bf16 %v391
        %v495 = vunpack.c.l.bf16 %v392
        %v496 = vunpack.c.h.bf16 %v392
        %v497 = vunpack.c.l.bf16 %v393
        %v498 = vunpack.c.h.bf16 %v393
        %v499 = vunpack.c.l.bf16 %v394
        %v500 = vunpack.c.h.bf16 %v394
        %v501 = vunpack.c.l.bf16 %v395
        %v502 = vunpack.c.h.bf16 %v395
        %v503 = vunpack.c.l.bf16 %v396
        %v504 = vunpack.c.h.bf16 %v396
        %v505 = vunpack.c.l.bf16 %v397
        %v506 = vunpack.c.h.bf16 %v397
        %v507 = vunpack.c.l.bf16 %v398
        %v508 = vunpack.c.h.bf16 %v398
        %v509 = vunpack.c.l.bf16 %v399
        %v510 = vunpack.c.h.bf16 %v399
        %v511 = vunpack.c.l.bf16 %v400
        %v512 = vunpack.c.h.bf16 %v400
        %v513 = vunpack.c.l.bf16 %v401
        %v514 = vunpack.c.h.bf16 %v401
        %v515 = vunpack.c.l.bf16 %v402
        %v516 = vunpack.c.h.bf16 %v402
        %v517 = vunpack.c.l.bf16 %v403
        %v518 = vunpack.c.h.bf16 %v403
        %v519 = vunpack.c.l.bf16 %v404
        %v520 = vunpack.c.h.bf16 %v404
        %v521 = vunpack.c.l.bf16 %v405
        %v522 = vunpack.c.h.bf16 %v405
        %v523 = vunpack.c.l.bf16 %v406
        %v524 = vunpack.c.h.bf16 %v406
        %v525 = vunpack.c.l.bf16 %v407
        %v526 = vunpack.c.h.bf16 %v407
        %v527 = vunpack.c.l.bf16 %v408
        %v528 = vunpack.c.h.bf16 %v408
        %v529 = vunpack.c.l.bf16 %v409
        %v530 = vunpack.c.h.bf16 %v409
        %v531 = vunpack.c.l.bf16 %v410
        %v532 = vunpack.c.h.bf16 %v410
        %v533 = vunpack.c.l.bf16 %v411
        %v534 = vunpack.c.h.bf16 %v411
        %v535 = vunpack.c.l.bf16 %v412
        %v536 = vunpack.c.h.bf16 %v412
        %v537 = vunpack.c.l.bf16 %v413
        %v538 = vunpack.c.h.bf16 %v413
        %v539 = vunpack.c.l.bf16 %v414
        %v540 = vunpack.c.h.bf16 %v414
        %v541 = vunpack.c.l.bf16 %v415
        %v542 = vunpack.c.h.bf16 %v415
        %v543 = vunpack.c.l.bf16 %v416
        %v544 = vunpack.c.h.bf16 %v416
        %v545 = vld [vmem:[%s299] sm:$0xff]
        %v546 = vld [vmem:[%s299 + $0x8] sm:$0xff]
        %v547 = vld [vmem:[%s299 + $0x10] sm:$0xff]
        %v548 = vld [vmem:[%s299 + $0x18] sm:$0xff]
        %v549 = vld [vmem:[%s299 + $0x20] sm:$0xff]
        %v550 = vld [vmem:[%s299 + $0x28] sm:$0xff]
        %v551 = vld [vmem:[%s299 + $0x30] sm:$0xff]
        %v552 = vld [vmem:[%s299 + $0x38] sm:$0xff]
        %v553 = vld [vmem:[%s299 + $0x40] sm:$0xff]
        %v554 = vld [vmem:[%s299 + $0x48] sm:$0xff]
        %v555 = vld [vmem:[%s299 + $0x50] sm:$0xff]
        %v556 = vld [vmem:[%s299 + $0x58] sm:$0xff]
        %v557 = vld [vmem:[%s299 + $0x60] sm:$0xff]
        %v558 = vld [vmem:[%s299 + $0x68] sm:$0xff]
        %v559 = vld [vmem:[%s299 + $0x70] sm:$0xff]
        %v560 = vld [vmem:[%s299 + $0x78] sm:$0xff]
        %v561 = vld [vmem:[%s299 + $0x80] sm:$0xff]
        %v562 = vld [vmem:[%s299 + $0x88] sm:$0xff]
        %v563 = vld [vmem:[%s299 + $0x90] sm:$0xff]
        %v564 = vld [vmem:[%s299 + $0x98] sm:$0xff]
        %v565 = vld [vmem:[%s299 + $0xa0] sm:$0xff]
        %v566 = vld [vmem:[%s299 + $0xa8] sm:$0xff]
        %v567 = vld [vmem:[%s299 + $0xb0] sm:$0xff]
        %v568 = vld [vmem:[%s299 + $0xb8] sm:$0xff]
        %v569 = vld [vmem:[%s299 + $0xc0] sm:$0xff]
        %v570 = vld [vmem:[%s299 + $0xc8] sm:$0xff]
        %v571 = vld [vmem:[%s299 + $0xd0] sm:$0xff]
        %v572 = vld [vmem:[%s299 + $0xd8] sm:$0xff]
        %v573 = vld [vmem:[%s299 + $0xe0] sm:$0xff]
        %v574 = vld [vmem:[%s299 + $0xe8] sm:$0xff]
        %v575 = vld [vmem:[%s299 + $0xf0] sm:$0xff]
        %v576 = vld [vmem:[%s299 + $0xf8] sm:$0xff]
        %v577 = vld [vmem:[%s299 + $0x100] sm:$0xff]
        %v578 = vld [vmem:[%s299 + $0x108] sm:$0xff]
        %v579 = vld [vmem:[%s299 + $0x110] sm:$0xff]
        %v580 = vld [vmem:[%s299 + $0x118] sm:$0xff]
        %v581 = vld [vmem:[%s299 + $0x120] sm:$0xff]
        %v582 = vld [vmem:[%s299 + $0x128] sm:$0xff]
        %v583 = vld [vmem:[%s299 + $0x130] sm:$0xff]
        %v584 = vld [vmem:[%s299 + $0x138] sm:$0xff]
        %v585 = vld [vmem:[%s299 + $0x140] sm:$0xff]
        %v586 = vld [vmem:[%s299 + $0x148] sm:$0xff]
        %v587 = vld [vmem:[%s299 + $0x150] sm:$0xff]
        %v588 = vld [vmem:[%s299 + $0x158] sm:$0xff]
        %v589 = vld [vmem:[%s299 + $0x160] sm:$0xff]
        %v590 = vld [vmem:[%s299 + $0x168] sm:$0xff]
        %v591 = vld [vmem:[%s299 + $0x170] sm:$0xff]
        %v592 = vld [vmem:[%s299 + $0x178] sm:$0xff]
        %v593 = vld [vmem:[%s299 + $0x180] sm:$0xff]
        %v594 = vld [vmem:[%s299 + $0x188] sm:$0xff]
        %v595 = vld [vmem:[%s299 + $0x190] sm:$0xff]
        %v596 = vld [vmem:[%s299 + $0x198] sm:$0xff]
        %v597 = vld [vmem:[%s299 + $0x1a0] sm:$0xff]
        %v598 = vld [vmem:[%s299 + $0x1a8] sm:$0xff]
        %v599 = vld [vmem:[%s299 + $0x1b0] sm:$0xff]
        %v600 = vld [vmem:[%s299 + $0x1b8] sm:$0xff]
        %v601 = vld [vmem:[%s299 + $0x1c0] sm:$0xff]
        %v602 = vld [vmem:[%s299 + $0x1c8] sm:$0xff]
        %v603 = vld [vmem:[%s299 + $0x1d0] sm:$0xff]
        %v604 = vld [vmem:[%s299 + $0x1d8] sm:$0xff]
        %v605 = vld [vmem:[%s299 + $0x1e0] sm:$0xff]
        %v606 = vld [vmem:[%s299 + $0x1e8] sm:$0xff]
        %v607 = vld [vmem:[%s299 + $0x1f0] sm:$0xff]
        %v608 = vld [vmem:[%s299 + $0x1f8] sm:$0xff]
        %v609 = vunpack.c.l.bf16 %v545
        %v610 = vunpack.c.h.bf16 %v545
        %v611 = vunpack.c.l.bf16 %v546
        %v612 = vunpack.c.h.bf16 %v546
        %v613 = vunpack.c.l.bf16 %v547
        %v614 = vunpack.c.h.bf16 %v547
        %v615 = vunpack.c.l.bf16 %v548
        %v616 = vunpack.c.h.bf16 %v548
        %v617 = vunpack.c.l.bf16 %v549
        %v618 = vunpack.c.h.bf16 %v549
        %v619 = vunpack.c.l.bf16 %v550
        %v620 = vunpack.c.h.bf16 %v550
        %v621 = vunpack.c.l.bf16 %v551
        %v622 = vunpack.c.h.bf16 %v551
        %v623 = vunpack.c.l.bf16 %v552
        %v624 = vunpack.c.h.bf16 %v552
        %v625 = vunpack.c.l.bf16 %v553
        %v626 = vunpack.c.h.bf16 %v553
        %v627 = vunpack.c.l.bf16 %v554
        %v628 = vunpack.c.h.bf16 %v554
        %v629 = vunpack.c.l.bf16 %v555
        %v630 = vunpack.c.h.bf16 %v555
        %v631 = vunpack.c.l.bf16 %v556
        %v632 = vunpack.c.h.bf16 %v556
        %v633 = vunpack.c.l.bf16 %v557
        %v634 = vunpack.c.h.bf16 %v557
        %v635 = vunpack.c.l.bf16 %v558
        %v636 = vunpack.c.h.bf16 %v558
        %v637 = vunpack.c.l.bf16 %v559
        %v638 = vunpack.c.h.bf16 %v559
        %v639 = vunpack.c.l.bf16 %v560
        %v640 = vunpack.c.h.bf16 %v560
        %v641 = vunpack.c.l.bf16 %v561
        %v642 = vunpack.c.h.bf16 %v561
        %v643 = vunpack.c.l.bf16 %v562
        %v644 = vunpack.c.h.bf16 %v562
        %v645 = vunpack.c.l.bf16 %v563
        %v646 = vunpack.c.h.bf16 %v563
        %v647 = vunpack.c.l.bf16 %v564
        %v648 = vunpack.c.h.bf16 %v564
        %v649 = vunpack.c.l.bf16 %v565
        %v650 = vunpack.c.h.bf16 %v565
        %v651 = vunpack.c.l.bf16 %v566
        %v652 = vunpack.c.h.bf16 %v566
        %v653 = vunpack.c.l.bf16 %v567
        %v654 = vunpack.c.h.bf16 %v567
        %v655 = vunpack.c.l.bf16 %v568
        %v656 = vunpack.c.h.bf16 %v568
        %v657 = vunpack.c.l.bf16 %v569
        %v658 = vunpack.c.h.bf16 %v569
        %v659 = vunpack.c.l.bf16 %v570
        %v660 = vunpack.c.h.bf16 %v570
        %v661 = vunpack.c.l.bf16 %v571
        %v662 = vunpack.c.h.bf16 %v571
        %v663 = vunpack.c.l.bf16 %v572
        %v664 = vunpack.c.h.bf16 %v572
        %v665 = vunpack.c.l.bf16 %v573
        %v666 = vunpack.c.h.bf16 %v573
        %v667 = vunpack.c.l.bf16 %v574
        %v668 = vunpack.c.h.bf16 %v574
        %v669 = vunpack.c.l.bf16 %v575
        %v670 = vunpack.c.h.bf16 %v575
        %v671 = vunpack.c.l.bf16 %v576
        %v672 = vunpack.c.h.bf16 %v576
        %v673 = vunpack.c.l.bf16 %v577
        %v674 = vunpack.c.h.bf16 %v577
        %v675 = vunpack.c.l.bf16 %v578
        %v676 = vunpack.c.h.bf16 %v578
        %v677 = vunpack.c.l.bf16 %v579
        %v678 = vunpack.c.h.bf16 %v579
        %v679 = vunpack.c.l.bf16 %v580
        %v680 = vunpack.c.h.bf16 %v580
        %v681 = vunpack.c.l.bf16 %v581
        %v682 = vunpack.c.h.bf16 %v581
        %v683 = vunpack.c.l.bf16 %v582
        %v684 = vunpack.c.h.bf16 %v582
        %v685 = vunpack.c.l.bf16 %v583
        %v686 = vunpack.c.h.bf16 %v583
        %v687 = vunpack.c.l.bf16 %v584
        %v688 = vunpack.c.h.bf16 %v584
        %v689 = vunpack.c.l.bf16 %v585
        %v690 = vunpack.c.h.bf16 %v585
        %v691 = vunpack.c.l.bf16 %v586
        %v692 = vunpack.c.h.bf16 %v586
        %v693 = vunpack.c.l.bf16 %v587
        %v694 = vunpack.c.h.bf16 %v587
        %v695 = vunpack.c.l.bf16 %v588
        %v696 = vunpack.c.h.bf16 %v588
        %v697 = vunpack.c.l.bf16 %v589
        %v698 = vunpack.c.h.bf16 %v589
        %v699 = vunpack.c.l.bf16 %v590
        %v700 = vunpack.c.h.bf16 %v590
        %v701 = vunpack.c.l.bf16 %v591
        %v702 = vunpack.c.h.bf16 %v591
        %v703 = vunpack.c.l.bf16 %v592
        %v704 = vunpack.c.h.bf16 %v592
        %v705 = vunpack.c.l.bf16 %v593
        %v706 = vunpack.c.h.bf16 %v593
        %v707 = vunpack.c.l.bf16 %v594
        %v708 = vunpack.c.h.bf16 %v594
        %v709 = vunpack.c.l.bf16 %v595
        %v710 = vunpack.c.h.bf16 %v595
        %v711 = vunpack.c.l.bf16 %v596
        %v712 = vunpack.c.h.bf16 %v596
        %v713 = vunpack.c.l.bf16 %v597
        %v714 = vunpack.c.h.bf16 %v597
        %v715 = vunpack.c.l.bf16 %v598
        %v716 = vunpack.c.h.bf16 %v598
        %v717 = vunpack.c.l.bf16 %v599
        %v718 = vunpack.c.h.bf16 %v599
        %v719 = vunpack.c.l.bf16 %v600
        %v720 = vunpack.c.h.bf16 %v600
        %v721 = vunpack.c.l.bf16 %v601
        %v722 = vunpack.c.h.bf16 %v601
        %v723 = vunpack.c.l.bf16 %v602
        %v724 = vunpack.c.h.bf16 %v602
        %v725 = vunpack.c.l.bf16 %v603
        %v726 = vunpack.c.h.bf16 %v603
        %v727 = vunpack.c.l.bf16 %v604
        %v728 = vunpack.c.h.bf16 %v604
        %v729 = vunpack.c.l.bf16 %v605
        %v730 = vunpack.c.h.bf16 %v605
        %v731 = vunpack.c.l.bf16 %v606
        %v732 = vunpack.c.h.bf16 %v606
        %v733 = vunpack.c.l.bf16 %v607
        %v734 = vunpack.c.h.bf16 %v607
        %v735 = vunpack.c.l.bf16 %v608
        %v736 = vunpack.c.h.bf16 %v608
        %v737 = vld [vmem:[%s352] sm:$0xff]
        %v738 = vld [vmem:[%s352 + $0x8] sm:$0xff]
        %v739 = vld [vmem:[%s347] sm:$0xff]
        %v740 = vld [vmem:[%s347 + $0x8] sm:$0xff]
        %v741 = vld [vmem:[%s347 + $0x10] sm:$0xff]
        %v742 = vld [vmem:[%s347 + $0x18] sm:$0xff]
        %v743 = vld [vmem:[%s347 + $0x20] sm:$0xff]
        %v744 = vld [vmem:[%s347 + $0x28] sm:$0xff]
        %745 = vmatpush.msra.mxu0 %v477
        %746 = vmatpush.msra.mxu0 %v473
        %747 = vmatpush.msra.mxu0 %v469
        %748 = vmatpush.msra.mxu0 %v465
        %749 = vmatpush.msra.mxu0 %v461
        %750 = vmatpush.msra.mxu0 %v457
        %751 = vmatpush.msra.mxu0 %v453
        %752 = vmatpush.msra.mxu0 %v449
        %753 = vmatpush.msra.mxu0 %v445
        %754 = vmatpush.msra.mxu0 %v441
        %755 = vmatpush.msra.mxu0 %v437
        %756 = vmatpush.msra.mxu0 %v433
        %757 = vmatpush.msra.mxu0 %v429
        %758 = vmatpush.msra.mxu0 %v425
        %759 = vmatpush.msra.mxu0 %v421
        %760 = vmatpush.msra.mxu0 %v417
        %761 = vmatmul.f32.gmra.mxu0 %v739
        %v762 = vpop.f32.mrf.mxu0
        %v763 = vadd.f32 0.0, %v762
        %764 = vmatmul.f32.gmra.mxu0 %v741
        %v765 = vpop.f32.mrf.mxu0
        %v766 = vadd.f32 0.0, %v765
        %767 = vmatmul.f32.gmra.mxu0 %v743
        %v768 = vpop.f32.mrf.mxu0
        %v769 = vadd.f32 0.0, %v768
        %770 = vdwg.mxu0
        %771 = vmatpush.msra.mxu0 %v541
        %772 = vmatpush.msra.mxu0 %v537
        %773 = vmatpush.msra.mxu0 %v533
        %774 = vmatpush.msra.mxu0 %v529
        %775 = vmatpush.msra.mxu0 %v525
        %776 = vmatpush.msra.mxu0 %v521
        %777 = vmatpush.msra.mxu0 %v517
        %778 = vmatpush.msra.mxu0 %v513
        %779 = vmatpush.msra.mxu0 %v509
        %780 = vmatpush.msra.mxu0 %v505
        %781 = vmatpush.msra.mxu0 %v501
        %782 = vmatpush.msra.mxu0 %v497
        %783 = vmatpush.msra.mxu0 %v493
        %784 = vmatpush.msra.mxu0 %v489
        %785 = vmatpush.msra.mxu0 %v485
        %786 = vmatpush.msra.mxu0 %v481
        %787 = vmatmul.f32.gmra.mxu0 %v740
        %v788 = vpop.f32.mrf.mxu0
        %v789 = vadd.f32 %v763, %v788
        %790 = vmatmul.f32.gmra.mxu0 %v742
        %v791 = vpop.f32.mrf.mxu0
        %v792 = vadd.f32 %v766, %v791
        %793 = vmatmul.f32.gmra.mxu0 %v744
        %v794 = vpop.f32.mrf.mxu0
        %v795 = vadd.f32 %v769, %v794
        %796 = vdwg.mxu0
        %797 = vmatpush.msra.mxu0 %v478
        %798 = vmatpush.msra.mxu0 %v474
        %799 = vmatpush.msra.mxu0 %v470
        %800 = vmatpush.msra.mxu0 %v466
        %801 = vmatpush.msra.mxu0 %v462
        %802 = vmatpush.msra.mxu0 %v458
        %803 = vmatpush.msra.mxu0 %v454
        %804 = vmatpush.msra.mxu0 %v450
        %805 = vmatpush.msra.mxu0 %v446
        %806 = vmatpush.msra.mxu0 %v442
        %807 = vmatpush.msra.mxu0 %v438
        %808 = vmatpush.msra.mxu0 %v434
        %809 = vmatpush.msra.mxu0 %v430
        %810 = vmatpush.msra.mxu0 %v426
        %811 = vmatpush.msra.mxu0 %v422
        %812 = vmatpush.msra.mxu0 %v418
        %813 = vmatmul.f32.gmra.mxu0 %v739
        %v814 = vpop.f32.mrf.mxu0
        %v815 = vadd.f32 0.0, %v814
        %816 = vmatmul.f32.gmra.mxu0 %v741
        %v817 = vpop.f32.mrf.mxu0
        %v818 = vadd.f32 0.0, %v817
        %819 = vmatmul.f32.gmra.mxu0 %v743
        %v820 = vpop.f32.mrf.mxu0
        %v821 = vadd.f32 0.0, %v820
        %822 = vdwg.mxu0
        %823 = vmatpush.msra.mxu0 %v542
        %824 = vmatpush.msra.mxu0 %v538
        %825 = vmatpush.msra.mxu0 %v534
        %826 = vmatpush.msra.mxu0 %v530
        %827 = vmatpush.msra.mxu0 %v526
        %828 = vmatpush.msra.mxu0 %v522
        %829 = vmatpush.msra.mxu0 %v518
        %830 = vmatpush.msra.mxu0 %v514
        %831 = vmatpush.msra.mxu0 %v510
        %832 = vmatpush.msra.mxu0 %v506
        %833 = vmatpush.msra.mxu0 %v502
        %834 = vmatpush.msra.mxu0 %v498
        %835 = vmatpush.msra.mxu0 %v494
        %836 = vmatpush.msra.mxu0 %v490
        %837 = vmatpush.msra.mxu0 %v486
        %838 = vmatpush.msra.mxu0 %v482
        %839 = vmatmul.f32.gmra.mxu0 %v740
        %v840 = vpop.f32.mrf.mxu0
        %v841 = vadd.f32 %v815, %v840
        %842 = vmatmul.f32.gmra.mxu0 %v742
        %v843 = vpop.f32.mrf.mxu0
        %v844 = vadd.f32 %v818, %v843
        %845 = vmatmul.f32.gmra.mxu0 %v744
        %v846 = vpop.f32.mrf.mxu0
        %v847 = vadd.f32 %v821, %v846
        %848 = vdwg.mxu0
        %849 = vmatpush.msra.mxu0 %v479
        %850 = vmatpush.msra.mxu0 %v475
        %851 = vmatpush.msra.mxu0 %v471
        %852 = vmatpush.msra.mxu0 %v467
        %853 = vmatpush.msra.mxu0 %v463
        %854 = vmatpush.msra.mxu0 %v459
        %855 = vmatpush.msra.mxu0 %v455
        %856 = vmatpush.msra.mxu0 %v451
        %857 = vmatpush.msra.mxu0 %v447
        %858 = vmatpush.msra.mxu0 %v443
        %859 = vmatpush.msra.mxu0 %v439
        %860 = vmatpush.msra.mxu0 %v435
        %861 = vmatpush.msra.mxu0 %v431
        %862 = vmatpush.msra.mxu0 %v427
        %863 = vmatpush.msra.mxu0 %v423
        %864 = vmatpush.msra.mxu0 %v419
        %865 = vmatmul.f32.gmra.mxu0 %v739
        %v866 = vpop.f32.mrf.mxu0
        %v867 = vadd.f32 0.0, %v866
        %868 = vmatmul.f32.gmra.mxu0 %v741
        %v869 = vpop.f32.mrf.mxu0
        %v870 = vadd.f32 0.0, %v869
        %871 = vmatmul.f32.gmra.mxu0 %v743
        %v872 = vpop.f32.mrf.mxu0
        %v873 = vadd.f32 0.0, %v872
        %874 = vdwg.mxu0
        %875 = vmatpush.msra.mxu0 %v543
        %876 = vmatpush.msra.mxu0 %v539
        %877 = vmatpush.msra.mxu0 %v535
        %878 = vmatpush.msra.mxu0 %v531
        %879 = vmatpush.msra.mxu0 %v527
        %880 = vmatpush.msra.mxu0 %v523
        %881 = vmatpush.msra.mxu0 %v519
        %882 = vmatpush.msra.mxu0 %v515
        %883 = vmatpush.msra.mxu0 %v511
        %884 = vmatpush.msra.mxu0 %v507
        %885 = vmatpush.msra.mxu0 %v503
        %886 = vmatpush.msra.mxu0 %v499
        %887 = vmatpush.msra.mxu0 %v495
        %888 = vmatpush.msra.mxu0 %v491
        %889 = vmatpush.msra.mxu0 %v487
        %890 = vmatpush.msra.mxu0 %v483
        %891 = vmatmul.f32.gmra.mxu0 %v740
        %v892 = vpop.f32.mrf.mxu0
        %v893 = vadd.f32 %v867, %v892
        %894 = vmatmul.f32.gmra.mxu0 %v742
        %v895 = vpop.f32.mrf.mxu0
        %v896 = vadd.f32 %v870, %v895
        %897 = vmatmul.f32.gmra.mxu0 %v744
        %v898 = vpop.f32.mrf.mxu0
        %v899 = vadd.f32 %v873, %v898
        %900 = vdwg.mxu0
        %901 = vmatpush.msra.mxu0 %v480
        %902 = vmatpush.msra.mxu0 %v476
        %903 = vmatpush.msra.mxu0 %v472
        %904 = vmatpush.msra.mxu0 %v468
        %905 = vmatpush.msra.mxu0 %v464
        %906 = vmatpush.msra.mxu0 %v460
        %907 = vmatpush.msra.mxu0 %v456
        %908 = vmatpush.msra.mxu0 %v452
        %909 = vmatpush.msra.mxu0 %v448
        %910 = vmatpush.msra.mxu0 %v444
        %911 = vmatpush.msra.mxu0 %v440
        %912 = vmatpush.msra.mxu0 %v436
        %913 = vmatpush.msra.mxu0 %v432
        %914 = vmatpush.msra.mxu0 %v428
        %915 = vmatpush.msra.mxu0 %v424
        %916 = vmatpush.msra.mxu0 %v420
        %917 = vmatmul.f32.gmra.mxu0 %v739
        %v918 = vpop.f32.mrf.mxu0
        %v919 = vadd.f32 0.0, %v918
        %920 = vmatmul.f32.gmra.mxu0 %v741
        %v921 = vpop.f32.mrf.mxu0
        %v922 = vadd.f32 0.0, %v921
        %923 = vmatmul.f32.gmra.mxu0 %v743
        %v924 = vpop.f32.mrf.mxu0
        %v925 = vadd.f32 0.0, %v924
        %926 = vdwg.mxu0
        %927 = vmatpush.msra.mxu0 %v544
        %928 = vmatpush.msra.mxu0 %v540
        %929 = vmatpush.msra.mxu0 %v536
        %930 = vmatpush.msra.mxu0 %v532
        %931 = vmatpush.msra.mxu0 %v528
        %932 = vmatpush.msra.mxu0 %v524
        %933 = vmatpush.msra.mxu0 %v520
        %934 = vmatpush.msra.mxu0 %v516
        %935 = vmatpush.msra.mxu0 %v512
        %936 = vmatpush.msra.mxu0 %v508
        %937 = vmatpush.msra.mxu0 %v504
        %938 = vmatpush.msra.mxu0 %v500
        %939 = vmatpush.msra.mxu0 %v496
        %940 = vmatpush.msra.mxu0 %v492
        %941 = vmatpush.msra.mxu0 %v488
        %942 = vmatpush.msra.mxu0 %v484
        %943 = vmatmul.f32.gmra.mxu0 %v740
        %v944 = vpop.f32.mrf.mxu0
        %v945 = vadd.f32 %v919, %v944
        %946 = vmatmul.f32.gmra.mxu0 %v742
        %v947 = vpop.f32.mrf.mxu0
        %v948 = vadd.f32 %v922, %v947
        %949 = vmatmul.f32.gmra.mxu0 %v744
        %v950 = vpop.f32.mrf.mxu0
        %v951 = vadd.f32 %v925, %v950
        %952 = vdwg.mxu0
        %v955 = vperm.slane %v737, 0
        %v956 = vperm.slane %v737, 4
        %v957 = vperm.slane %v738, 0
        %v958 = vperm.slane %v738, 4
        %v963 = vperm.slane %v955, 0
        %v964 = vperm.slane %v956, 0
        %v965 = vperm.slane %v957, 0
        %v966 = vperm.slane %v958, 0
        %v967 = vmul.f32 %v963, %v789
        %v968 = vmul.f32 %v964, %v841
        %v969 = vmul.f32 %v965, %v893
        %v970 = vmul.f32 %v966, %v945
        %v971 = vmul.f32 %v963, %v792
        %v972 = vmul.f32 %v964, %v844
        %v973 = vmul.f32 %v965, %v896
        %v974 = vmul.f32 %v966, %v948
        %v975 = vmul.f32 %v963, %v795
        %v976 = vmul.f32 %v964, %v847
        %v977 = vmul.f32 %v965, %v899
        %v978 = vmul.f32 %v966, %v951
        %v979 = vperm.slane %v737, 1
        %v980 = vperm.slane %v737, 5
        %v981 = vperm.slane %v738, 1
        %v982 = vperm.slane %v738, 5
        %v987 = vperm.slane %v979, 1
        %v988 = vperm.slane %v980, 1
        %v989 = vperm.slane %v981, 1
        %v990 = vperm.slane %v982, 1
        %v991 = vmul.f32 %v987, %v789
        %v992 = vmul.f32 %v988, %v841
        %v993 = vmul.f32 %v989, %v893
        %v994 = vmul.f32 %v990, %v945
        %v995 = vmul.f32 %v987, %v792
        %v996 = vmul.f32 %v988, %v844
        %v997 = vmul.f32 %v989, %v896
        %v998 = vmul.f32 %v990, %v948
        %v999 = vmul.f32 %v987, %v795
        %v1000 = vmul.f32 %v988, %v847
        %v1001 = vmul.f32 %v989, %v899
        %v1002 = vmul.f32 %v990, %v951
        %v1003 = vperm.slane %v737, 2
        %v1004 = vperm.slane %v737, 6
        %v1005 = vperm.slane %v738, 2
        %v1006 = vperm.slane %v738, 6
        %v1011 = vperm.slane %v1003, 2
        %v1012 = vperm.slane %v1004, 2
        %v1013 = vperm.slane %v1005, 2
        %v1014 = vperm.slane %v1006, 2
        %v1015 = vmul.f32 %v1011, %v789
        %v1016 = vmul.f32 %v1012, %v841
        %v1017 = vmul.f32 %v1013, %v893
        %v1018 = vmul.f32 %v1014, %v945
        %v1019 = vmul.f32 %v1011, %v792
        %v1020 = vmul.f32 %v1012, %v844
        %v1021 = vmul.f32 %v1013, %v896
        %v1022 = vmul.f32 %v1014, %v948
        %v1023 = vmul.f32 %v1011, %v795
        %v1024 = vmul.f32 %v1012, %v847
        %v1025 = vmul.f32 %v1013, %v899
        %v1026 = vmul.f32 %v1014, %v951
        %v1027 = vperm.slane %v737, 3
        %v1028 = vperm.slane %v737, 7
        %v1029 = vperm.slane %v738, 3
        %v1030 = vperm.slane %v738, 7
        %v1035 = vperm.slane %v1027, 3
        %v1036 = vperm.slane %v1028, 3
        %v1037 = vperm.slane %v1029, 3
        %v1038 = vperm.slane %v1030, 3
        %v1039 = vmul.f32 %v1035, %v789
        %v1040 = vmul.f32 %v1036, %v841
        %v1041 = vmul.f32 %v1037, %v893
        %v1042 = vmul.f32 %v1038, %v945
        %v1043 = vmul.f32 %v1035, %v792
        %v1044 = vmul.f32 %v1036, %v844
        %v1045 = vmul.f32 %v1037, %v896
        %v1046 = vmul.f32 %v1038, %v948
        %v1047 = vmul.f32 %v1035, %v795
        %v1048 = vmul.f32 %v1036, %v847
        %v1049 = vmul.f32 %v1037, %v899
        %v1050 = vmul.f32 %v1038, %v951
        %v1051 = vld [vmem:[%s4] sm:$0xff]
        %v1052 = vld [vmem:[%s4 + $0x8] sm:$0xff]
        %vm1053 = vcmask 982016
        %v1055 = vsel %vm1053, %v1051, 0
        %v1058 = vsel %vm1053, %v1052, 0
        %1060 = vmatpush.msra.mxu0 0.0
        %1061 = vmatpush.msra.mxu0 %v1047
        %1062 = vmatpush.msra.mxu0 %v1043
        %1063 = vmatpush.msra.mxu0 %v1039
        %1064 = vmatpush.msra.mxu0 %v1023
        %1065 = vmatpush.msra.mxu0 %v1019
        %1066 = vmatpush.msra.mxu0 %v1015
        %1067 = vmatpush.msra.mxu0 %v999
        %1068 = vmatpush.msra.mxu0 %v995
        %1069 = vmatpush.msra.mxu0 %v991
        %1070 = vmatpush.msra.mxu0 %v975
        %1071 = vmatpush.msra.mxu0 %v971
        %1072 = vmatpush.msra.mxu0 %v967
        %1073 = vmatpush.msra.mxu0 %v795
        %1074 = vmatpush.msra.mxu0 %v792
        %1075 = vmatpush.msra.mxu0 %v789
        %1076 = vmatmul.f32.gmra.mxu0 %v1055
        %v1077 = vpop.f32.mrf.mxu0
        %v1078 = vadd.f32 0.0, %v1077
        %1079 = vmatmul.f32.gmra.mxu0 %v1058
        %v1080 = vpop.f32.mrf.mxu0
        %v1081 = vadd.f32 0.0, %v1080
        %1082 = vdwg.mxu0
        %1083 = vmatpush.msra.mxu0 0.0
        %1084 = vmatpush.msra.mxu0 %v1048
        %1085 = vmatpush.msra.mxu0 %v1044
        %1086 = vmatpush.msra.mxu0 %v1040
        %1087 = vmatpush.msra.mxu0 %v1024
        %1088 = vmatpush.msra.mxu0 %v1020
        %1089 = vmatpush.msra.mxu0 %v1016
        %1090 = vmatpush.msra.mxu0 %v1000
        %1091 = vmatpush.msra.mxu0 %v996
        %1092 = vmatpush.msra.mxu0 %v992
        %1093 = vmatpush.msra.mxu0 %v976
        %1094 = vmatpush.msra.mxu0 %v972
        %1095 = vmatpush.msra.mxu0 %v968
        %1096 = vmatpush.msra.mxu0 %v847
        %1097 = vmatpush.msra.mxu0 %v844
        %1098 = vmatpush.msra.mxu0 %v841
        %1099 = vmatmul.f32.gmra.mxu0 %v1055
        %v1100 = vpop.f32.mrf.mxu0
        %v1101 = vadd.f32 0.0, %v1100
        %1102 = vmatmul.f32.gmra.mxu0 %v1058
        %v1103 = vpop.f32.mrf.mxu0
        %v1104 = vadd.f32 0.0, %v1103
        %1105 = vdwg.mxu0
        %1106 = vmatpush.msra.mxu0 0.0
        %1107 = vmatpush.msra.mxu0 %v1049
        %1108 = vmatpush.msra.mxu0 %v1045
        %1109 = vmatpush.msra.mxu0 %v1041
        %1110 = vmatpush.msra.mxu0 %v1025
        %1111 = vmatpush.msra.mxu0 %v1021
        %1112 = vmatpush.msra.mxu0 %v1017
        %1113 = vmatpush.msra.mxu0 %v1001
        %1114 = vmatpush.msra.mxu0 %v997
        %1115 = vmatpush.msra.mxu0 %v993
        %1116 = vmatpush.msra.mxu0 %v977
        %1117 = vmatpush.msra.mxu0 %v973
        %1118 = vmatpush.msra.mxu0 %v969
        %1119 = vmatpush.msra.mxu0 %v899
        %1120 = vmatpush.msra.mxu0 %v896
        %1121 = vmatpush.msra.mxu0 %v893
        %1122 = vmatmul.f32.gmra.mxu0 %v1055
        %v1123 = vpop.f32.mrf.mxu0
        %v1124 = vadd.f32 0.0, %v1123
        %1125 = vmatmul.f32.gmra.mxu0 %v1058
        %v1126 = vpop.f32.mrf.mxu0
        %v1127 = vadd.f32 0.0, %v1126
        %1128 = vdwg.mxu0
        %1129 = vmatpush.msra.mxu0 0.0
        %1130 = vmatpush.msra.mxu0 %v1050
        %1131 = vmatpush.msra.mxu0 %v1046
        %1132 = vmatpush.msra.mxu0 %v1042
        %1133 = vmatpush.msra.mxu0 %v1026
        %1134 = vmatpush.msra.mxu0 %v1022
        %1135 = vmatpush.msra.mxu0 %v1018
        %1136 = vmatpush.msra.mxu0 %v1002
        %1137 = vmatpush.msra.mxu0 %v998
        %1138 = vmatpush.msra.mxu0 %v994
        %1139 = vmatpush.msra.mxu0 %v978
        %1140 = vmatpush.msra.mxu0 %v974
        %1141 = vmatpush.msra.mxu0 %v970
        %1142 = vmatpush.msra.mxu0 %v951
        %1143 = vmatpush.msra.mxu0 %v948
        %1144 = vmatpush.msra.mxu0 %v945
        %1145 = vmatmul.f32.gmra.mxu0 %v1055
        %v1146 = vpop.f32.mrf.mxu0
        %v1147 = vadd.f32 0.0, %v1146
        %1148 = vmatmul.f32.gmra.mxu0 %v1058
        %v1149 = vpop.f32.mrf.mxu0
        %v1150 = vadd.f32 0.0, %v1149
        %1151 = vdwg.mxu0
        %v1152 = vld [vmem:[%s4 + $0x10] sm:$0xff]
        %v1153 = vld [vmem:[%s4 + $0x18] sm:$0xff]
        %vm1154 = vcmask 195584
        %v1156 = vsel %vm1154, %v1152, 0
        %v1159 = vsel %vm1154, %v1153, 0
        %1161 = vmatpush.msra.mxu0 0.0
        %1162 = vmatpush.msra.mxu0 0.0
        %1163 = vmatpush.msra.mxu0 0.0
        %1164 = vmatpush.msra.mxu0 0.0
        %1165 = vmatpush.msra.mxu0 0.0
        %1166 = vmatpush.msra.mxu0 0.0
        %1167 = vmatpush.msra.mxu0 0.0
        %1168 = vmatpush.msra.mxu0 0.0
        %1169 = vmatpush.msra.mxu0 0.0
        %1170 = vmatpush.msra.mxu0 0.0
        %1171 = vmatpush.msra.mxu0 0.0
        %1172 = vmatpush.msra.mxu0 0.0
        %1173 = vmatpush.msra.mxu0 0.0
        %1174 = vmatpush.msra.mxu0 %v743
        %1175 = vmatpush.msra.mxu0 %v741
        %1176 = vmatpush.msra.mxu0 %v739
        %1177 = vmatmul.f32.gmra.mxu0 %v1156
        %v1178 = vpop.f32.mrf.mxu0
        %v1179 = vadd.f32 0.0, %v1178
        %1180 = vmatmul.f32.gmra.mxu0 %v1159
        %v1181 = vpop.f32.mrf.mxu0
        %v1182 = vadd.f32 0.0, %v1181
        %1183 = vdwg.mxu0
        %1184 = vmatpush.msra.mxu0 0.0
        %1185 = vmatpush.msra.mxu0 0.0
        %1186 = vmatpush.msra.mxu0 0.0
        %1187 = vmatpush.msra.mxu0 0.0
        %1188 = vmatpush.msra.mxu0 0.0
        %1189 = vmatpush.msra.mxu0 0.0
        %1190 = vmatpush.msra.mxu0 0.0
        %1191 = vmatpush.msra.mxu0 0.0
        %1192 = vmatpush.msra.mxu0 0.0
        %1193 = vmatpush.msra.mxu0 0.0
        %1194 = vmatpush.msra.mxu0 0.0
        %1195 = vmatpush.msra.mxu0 0.0
        %1196 = vmatpush.msra.mxu0 0.0
        %1197 = vmatpush.msra.mxu0 %v744
        %1198 = vmatpush.msra.mxu0 %v742
        %1199 = vmatpush.msra.mxu0 %v740
        %1200 = vmatmul.f32.gmra.mxu0 %v1156
        %v1201 = vpop.f32.mrf.mxu0
        %v1202 = vadd.f32 0.0, %v1201
        %1203 = vmatmul.f32.gmra.mxu0 %v1159
        %v1204 = vpop.f32.mrf.mxu0
        %v1205 = vadd.f32 0.0, %v1204
        %1206 = vdwg.mxu0
        %1207 = vmatpush.msra.mxu0 %v639
        %1208 = vmatpush.msra.mxu0 %v637
        %1209 = vmatpush.msra.mxu0 %v635
        %1210 = vmatpush.msra.mxu0 %v633
        %1211 = vmatpush.msra.mxu0 %v631
        %1212 = vmatpush.msra.mxu0 %v629
        %1213 = vmatpush.msra.mxu0 %v627
        %1214 = vmatpush.msra.mxu0 %v625
        %1215 = vmatpush.msra.mxu0 %v623
        %1216 = vmatpush.msra.mxu0 %v621
        %1217 = vmatpush.msra.mxu0 %v619
        %1218 = vmatpush.msra.mxu0 %v617
        %1219 = vmatpush.msra.mxu0 %v615
        %1220 = vmatpush.msra.mxu0 %v613
        %1221 = vmatpush.msra.mxu0 %v611
        %1222 = vmatpush.msra.mxu0 %v609
        %1223 = vmatmul.f32.gmra.mxu0 %v1078
        %v1224 = vpop.f32.mrf.mxu0
        %v1225 = vadd.f32 %v1179, %v1224
        %1226 = vmatmul.f32.gmra.mxu0 %v1081
        %v1227 = vpop.f32.mrf.mxu0
        %v1228 = vadd.f32 %v1182, %v1227
        %1229 = vdwg.mxu0
        %1230 = vmatpush.msra.mxu0 %v671
        %1231 = vmatpush.msra.mxu0 %v669
        %1232 = vmatpush.msra.mxu0 %v667
        %1233 = vmatpush.msra.mxu0 %v665
        %1234 = vmatpush.msra.mxu0 %v663
        %1235 = vmatpush.msra.mxu0 %v661
        %1236 = vmatpush.msra.mxu0 %v659
        %1237 = vmatpush.msra.mxu0 %v657
        %1238 = vmatpush.msra.mxu0 %v655
        %1239 = vmatpush.msra.mxu0 %v653
        %1240 = vmatpush.msra.mxu0 %v651
        %1241 = vmatpush.msra.mxu0 %v649
        %1242 = vmatpush.msra.mxu0 %v647
        %1243 = vmatpush.msra.mxu0 %v645
        %1244 = vmatpush.msra.mxu0 %v643
        %1245 = vmatpush.msra.mxu0 %v641
        %1246 = vmatmul.f32.gmra.mxu0 %v1101
        %v1247 = vpop.f32.mrf.mxu0
        %v1248 = vadd.f32 %v1225, %v1247
        %1249 = vmatmul.f32.gmra.mxu0 %v1104
        %v1250 = vpop.f32.mrf.mxu0
        %v1251 = vadd.f32 %v1228, %v1250
        %1252 = vdwg.mxu0
        %1253 = vmatpush.msra.mxu0 %v703
        %1254 = vmatpush.msra.mxu0 %v701
        %1255 = vmatpush.msra.mxu0 %v699
        %1256 = vmatpush.msra.mxu0 %v697
        %1257 = vmatpush.msra.mxu0 %v695
        %1258 = vmatpush.msra.mxu0 %v693
        %1259 = vmatpush.msra.mxu0 %v691
        %1260 = vmatpush.msra.mxu0 %v689
        %1261 = vmatpush.msra.mxu0 %v687
        %1262 = vmatpush.msra.mxu0 %v685
        %1263 = vmatpush.msra.mxu0 %v683
        %1264 = vmatpush.msra.mxu0 %v681
        %1265 = vmatpush.msra.mxu0 %v679
        %1266 = vmatpush.msra.mxu0 %v677
        %1267 = vmatpush.msra.mxu0 %v675
        %1268 = vmatpush.msra.mxu0 %v673
        %1269 = vmatmul.f32.gmra.mxu0 %v1124
        %v1270 = vpop.f32.mrf.mxu0
        %v1271 = vadd.f32 %v1248, %v1270
        %1272 = vmatmul.f32.gmra.mxu0 %v1127
        %v1273 = vpop.f32.mrf.mxu0
        %v1274 = vadd.f32 %v1251, %v1273
        %1275 = vdwg.mxu0
        %1276 = vmatpush.msra.mxu0 %v735
        %1277 = vmatpush.msra.mxu0 %v733
        %1278 = vmatpush.msra.mxu0 %v731
        %1279 = vmatpush.msra.mxu0 %v729
        %1280 = vmatpush.msra.mxu0 %v727
        %1281 = vmatpush.msra.mxu0 %v725
        %1282 = vmatpush.msra.mxu0 %v723
        %1283 = vmatpush.msra.mxu0 %v721
        %1284 = vmatpush.msra.mxu0 %v719
        %1285 = vmatpush.msra.mxu0 %v717
        %1286 = vmatpush.msra.mxu0 %v715
        %1287 = vmatpush.msra.mxu0 %v713
        %1288 = vmatpush.msra.mxu0 %v711
        %1289 = vmatpush.msra.mxu0 %v709
        %1290 = vmatpush.msra.mxu0 %v707
        %1291 = vmatpush.msra.mxu0 %v705
        %1292 = vmatmul.f32.gmra.mxu0 %v1147
        %v1293 = vpop.f32.mrf.mxu0
        %v1294 = vadd.f32 %v1271, %v1293
        %1295 = vmatmul.f32.gmra.mxu0 %v1150
        %v1296 = vpop.f32.mrf.mxu0
        %v1297 = vadd.f32 %v1274, %v1296
        %1298 = vdwg.mxu0
        %1299 = vmatpush.msra.mxu0 %v640
        %1300 = vmatpush.msra.mxu0 %v638
        %1301 = vmatpush.msra.mxu0 %v636
        %1302 = vmatpush.msra.mxu0 %v634
        %1303 = vmatpush.msra.mxu0 %v632
        %1304 = vmatpush.msra.mxu0 %v630
        %1305 = vmatpush.msra.mxu0 %v628
        %1306 = vmatpush.msra.mxu0 %v626
        %1307 = vmatpush.msra.mxu0 %v624
        %1308 = vmatpush.msra.mxu0 %v622
        %1309 = vmatpush.msra.mxu0 %v620
        %1310 = vmatpush.msra.mxu0 %v618
        %1311 = vmatpush.msra.mxu0 %v616
        %1312 = vmatpush.msra.mxu0 %v614
        %1313 = vmatpush.msra.mxu0 %v612
        %1314 = vmatpush.msra.mxu0 %v610
        %1315 = vmatmul.f32.gmra.mxu0 %v1078
        %v1316 = vpop.f32.mrf.mxu0
        %v1317 = vadd.f32 %v1202, %v1316
        %1318 = vmatmul.f32.gmra.mxu0 %v1081
        %v1319 = vpop.f32.mrf.mxu0
        %v1320 = vadd.f32 %v1205, %v1319
        %1321 = vdwg.mxu0
        %1322 = vmatpush.msra.mxu0 %v672
        %1323 = vmatpush.msra.mxu0 %v670
        %1324 = vmatpush.msra.mxu0 %v668
        %1325 = vmatpush.msra.mxu0 %v666
        %1326 = vmatpush.msra.mxu0 %v664
        %1327 = vmatpush.msra.mxu0 %v662
        %1328 = vmatpush.msra.mxu0 %v660
        %1329 = vmatpush.msra.mxu0 %v658
        %1330 = vmatpush.msra.mxu0 %v656
        %1331 = vmatpush.msra.mxu0 %v654
        %1332 = vmatpush.msra.mxu0 %v652
        %1333 = vmatpush.msra.mxu0 %v650
        %1334 = vmatpush.msra.mxu0 %v648
        %1335 = vmatpush.msra.mxu0 %v646
        %1336 = vmatpush.msra.mxu0 %v644
        %1337 = vmatpush.msra.mxu0 %v642
        %1338 = vmatmul.f32.gmra.mxu0 %v1101
        %v1339 = vpop.f32.mrf.mxu0
        %v1340 = vadd.f32 %v1317, %v1339
        %1341 = vmatmul.f32.gmra.mxu0 %v1104
        %v1342 = vpop.f32.mrf.mxu0
        %v1343 = vadd.f32 %v1320, %v1342
        %1344 = vdwg.mxu0
        %1345 = vmatpush.msra.mxu0 %v704
        %1346 = vmatpush.msra.mxu0 %v702
        %1347 = vmatpush.msra.mxu0 %v700
        %1348 = vmatpush.msra.mxu0 %v698
        %1349 = vmatpush.msra.mxu0 %v696
        %1350 = vmatpush.msra.mxu0 %v694
        %1351 = vmatpush.msra.mxu0 %v692
        %1352 = vmatpush.msra.mxu0 %v690
        %1353 = vmatpush.msra.mxu0 %v688
        %1354 = vmatpush.msra.mxu0 %v686
        %1355 = vmatpush.msra.mxu0 %v684
        %1356 = vmatpush.msra.mxu0 %v682
        %1357 = vmatpush.msra.mxu0 %v680
        %1358 = vmatpush.msra.mxu0 %v678
        %1359 = vmatpush.msra.mxu0 %v676
        %1360 = vmatpush.msra.mxu0 %v674
        %1361 = vmatmul.f32.gmra.mxu0 %v1124
        %v1362 = vpop.f32.mrf.mxu0
        %v1363 = vadd.f32 %v1340, %v1362
        %1364 = vmatmul.f32.gmra.mxu0 %v1127
        %v1365 = vpop.f32.mrf.mxu0
        %v1366 = vadd.f32 %v1343, %v1365
        %1367 = vdwg.mxu0
        %1368 = vmatpush.msra.mxu0 %v736
        %1369 = vmatpush.msra.mxu0 %v734
        %1370 = vmatpush.msra.mxu0 %v732
        %1371 = vmatpush.msra.mxu0 %v730
        %1372 = vmatpush.msra.mxu0 %v728
        %1373 = vmatpush.msra.mxu0 %v726
        %1374 = vmatpush.msra.mxu0 %v724
        %1375 = vmatpush.msra.mxu0 %v722
        %1376 = vmatpush.msra.mxu0 %v720
        %1377 = vmatpush.msra.mxu0 %v718
        %1378 = vmatpush.msra.mxu0 %v716
        %1379 = vmatpush.msra.mxu0 %v714
        %1380 = vmatpush.msra.mxu0 %v712
        %1381 = vmatpush.msra.mxu0 %v710
        %1382 = vmatpush.msra.mxu0 %v708
        %1383 = vmatpush.msra.mxu0 %v706
        %1384 = vmatmul.f32.gmra.mxu0 %v1147
        %v1385 = vpop.f32.mrf.mxu0
        %v1386 = vadd.f32 %v1363, %v1385
        %1387 = vmatmul.f32.gmra.mxu0 %v1150
        %v1388 = vpop.f32.mrf.mxu0
        %v1389 = vadd.f32 %v1366, %v1388
        %1390 = vdwg.mxu0
        %v1391 = vld [vmem:[%s4 + $0x20] sm:$0xff]
        %v1392 = vld [vmem:[%s4 + $0x28] sm:$0xff]
        %1394 = vset.pattern.permute.xlu0 0
        %1395 = vperm.xlu0 %1394, %v1391
        %v1396 = vpop.permute.xlu0 %1395
        %1399 = vset.pattern.permute.xlu0 0
        %1400 = vperm.xlu0 %1399, %v1392
        %v1401 = vpop.permute.xlu0 %1400
        %v1403 = vadd.f32 %v1294, %v1396
        %v1404 = vadd.f32 %v1386, %v1396
        %v1405 = vadd.f32 %v1297, %v1401
        %v1406 = vadd.f32 %v1389, %v1401
        %1407 = vmatpush.msra.mxu0 %v477
        %1408 = vmatpush.msra.mxu0 %v473
        %1409 = vmatpush.msra.mxu0 %v469
        %1410 = vmatpush.msra.mxu0 %v465
        %1411 = vmatpush.msra.mxu0 %v461
        %1412 = vmatpush.msra.mxu0 %v457
        %1413 = vmatpush.msra.mxu0 %v453
        %1414 = vmatpush.msra.mxu0 %v449
        %1415 = vmatpush.msra.mxu0 %v445
        %1416 = vmatpush.msra.mxu0 %v441
        %1417 = vmatpush.msra.mxu0 %v437
        %1418 = vmatpush.msra.mxu0 %v433
        %1419 = vmatpush.msra.mxu0 %v429
        %1420 = vmatpush.msra.mxu0 %v425
        %1421 = vmatpush.msra.mxu0 %v421
        %1422 = vmatpush.msra.mxu0 %v417
        %1423 = vmatmul.f32.gmra.mxu0 %v1403
        %v1424 = vpop.f32.mrf.mxu0
        %v1425 = vadd.f32 0.0, %v1424
        %1426 = vmatmul.f32.gmra.mxu0 %v1405
        %v1427 = vpop.f32.mrf.mxu0
        %v1428 = vadd.f32 0.0, %v1427
        %1429 = vdwg.mxu0
        %1430 = vmatpush.msra.mxu0 %v541
        %1431 = vmatpush.msra.mxu0 %v537
        %1432 = vmatpush.msra.mxu0 %v533
        %1433 = vmatpush.msra.mxu0 %v529
        %1434 = vmatpush.msra.mxu0 %v525
        %1435 = vmatpush.msra.mxu0 %v521
        %1436 = vmatpush.msra.mxu0 %v517
        %1437 = vmatpush.msra.mxu0 %v513
        %1438 = vmatpush.msra.mxu0 %v509
        %1439 = vmatpush.msra.mxu0 %v505
        %1440 = vmatpush.msra.mxu0 %v501
        %1441 = vmatpush.msra.mxu0 %v497
        %1442 = vmatpush.msra.mxu0 %v493
        %1443 = vmatpush.msra.mxu0 %v489
        %1444 = vmatpush.msra.mxu0 %v485
        %1445 = vmatpush.msra.mxu0 %v481
        %1446 = vmatmul.f32.gmra.mxu0 %v1404
        %v1447 = vpop.f32.mrf.mxu0
        %v1448 = vadd.f32 %v1425, %v1447
        %1449 = vmatmul.f32.gmra.mxu0 %v1406
        %v1450 = vpop.f32.mrf.mxu0
        %v1451 = vadd.f32 %v1428, %v1450
        %1452 = vdwg.mxu0
        %1453 = vmatpush.msra.mxu0 %v478
        %1454 = vmatpush.msra.mxu0 %v474
        %1455 = vmatpush.msra.mxu0 %v470
        %1456 = vmatpush.msra.mxu0 %v466
        %1457 = vmatpush.msra.mxu0 %v462
        %1458 = vmatpush.msra.mxu0 %v458
        %1459 = vmatpush.msra.mxu0 %v454
        %1460 = vmatpush.msra.mxu0 %v450
        %1461 = vmatpush.msra.mxu0 %v446
        %1462 = vmatpush.msra.mxu0 %v442
        %1463 = vmatpush.msra.mxu0 %v438
        %1464 = vmatpush.msra.mxu0 %v434
        %1465 = vmatpush.msra.mxu0 %v430
        %1466 = vmatpush.msra.mxu0 %v426
        %1467 = vmatpush.msra.mxu0 %v422
        %1468 = vmatpush.msra.mxu0 %v418
        %1469 = vmatmul.f32.gmra.mxu0 %v1403
        %v1470 = vpop.f32.mrf.mxu0
        %v1471 = vadd.f32 0.0, %v1470
        %1472 = vmatmul.f32.gmra.mxu0 %v1405
        %v1473 = vpop.f32.mrf.mxu0
        %v1474 = vadd.f32 0.0, %v1473
        %1475 = vdwg.mxu0
        %1476 = vmatpush.msra.mxu0 %v542
        %1477 = vmatpush.msra.mxu0 %v538
        %1478 = vmatpush.msra.mxu0 %v534
        %1479 = vmatpush.msra.mxu0 %v530
        %1480 = vmatpush.msra.mxu0 %v526
        %1481 = vmatpush.msra.mxu0 %v522
        %1482 = vmatpush.msra.mxu0 %v518
        %1483 = vmatpush.msra.mxu0 %v514
        %1484 = vmatpush.msra.mxu0 %v510
        %1485 = vmatpush.msra.mxu0 %v506
        %1486 = vmatpush.msra.mxu0 %v502
        %1487 = vmatpush.msra.mxu0 %v498
        %1488 = vmatpush.msra.mxu0 %v494
        %1489 = vmatpush.msra.mxu0 %v490
        %1490 = vmatpush.msra.mxu0 %v486
        %1491 = vmatpush.msra.mxu0 %v482
        %1492 = vmatmul.f32.gmra.mxu0 %v1404
        %v1493 = vpop.f32.mrf.mxu0
        %v1494 = vadd.f32 %v1471, %v1493
        %1495 = vmatmul.f32.gmra.mxu0 %v1406
        %v1496 = vpop.f32.mrf.mxu0
        %v1497 = vadd.f32 %v1474, %v1496
        %1498 = vdwg.mxu0
        %1499 = vmatpush.msra.mxu0 %v479
        %1500 = vmatpush.msra.mxu0 %v475
        %1501 = vmatpush.msra.mxu0 %v471
        %1502 = vmatpush.msra.mxu0 %v467
        %1503 = vmatpush.msra.mxu0 %v463
        %1504 = vmatpush.msra.mxu0 %v459
        %1505 = vmatpush.msra.mxu0 %v455
        %1506 = vmatpush.msra.mxu0 %v451
        %1507 = vmatpush.msra.mxu0 %v447
        %1508 = vmatpush.msra.mxu0 %v443
        %1509 = vmatpush.msra.mxu0 %v439
        %1510 = vmatpush.msra.mxu0 %v435
        %1511 = vmatpush.msra.mxu0 %v431
        %1512 = vmatpush.msra.mxu0 %v427
        %1513 = vmatpush.msra.mxu0 %v423
        %1514 = vmatpush.msra.mxu0 %v419
        %1515 = vmatmul.f32.gmra.mxu0 %v1403
        %v1516 = vpop.f32.mrf.mxu0
        %v1517 = vadd.f32 0.0, %v1516
        %1518 = vmatmul.f32.gmra.mxu0 %v1405
        %v1519 = vpop.f32.mrf.mxu0
        %v1520 = vadd.f32 0.0, %v1519
        %1521 = vdwg.mxu0
        %1522 = vmatpush.msra.mxu0 %v543
        %1523 = vmatpush.msra.mxu0 %v539
        %1524 = vmatpush.msra.mxu0 %v535
        %1525 = vmatpush.msra.mxu0 %v531
        %1526 = vmatpush.msra.mxu0 %v527
        %1527 = vmatpush.msra.mxu0 %v523
        %1528 = vmatpush.msra.mxu0 %v519
        %1529 = vmatpush.msra.mxu0 %v515
        %1530 = vmatpush.msra.mxu0 %v511
        %1531 = vmatpush.msra.mxu0 %v507
        %1532 = vmatpush.msra.mxu0 %v503
        %1533 = vmatpush.msra.mxu0 %v499
        %1534 = vmatpush.msra.mxu0 %v495
        %1535 = vmatpush.msra.mxu0 %v491
        %1536 = vmatpush.msra.mxu0 %v487
        %1537 = vmatpush.msra.mxu0 %v483
        %1538 = vmatmul.f32.gmra.mxu0 %v1404
        %v1539 = vpop.f32.mrf.mxu0
        %v1540 = vadd.f32 %v1517, %v1539
        %1541 = vmatmul.f32.gmra.mxu0 %v1406
        %v1542 = vpop.f32.mrf.mxu0
        %v1543 = vadd.f32 %v1520, %v1542
        %1544 = vdwg.mxu0
        %1545 = vmatpush.msra.mxu0 %v480
        %1546 = vmatpush.msra.mxu0 %v476
        %1547 = vmatpush.msra.mxu0 %v472
        %1548 = vmatpush.msra.mxu0 %v468
        %1549 = vmatpush.msra.mxu0 %v464
        %1550 = vmatpush.msra.mxu0 %v460
        %1551 = vmatpush.msra.mxu0 %v456
        %1552 = vmatpush.msra.mxu0 %v452
        %1553 = vmatpush.msra.mxu0 %v448
        %1554 = vmatpush.msra.mxu0 %v444
        %1555 = vmatpush.msra.mxu0 %v440
        %1556 = vmatpush.msra.mxu0 %v436
        %1557 = vmatpush.msra.mxu0 %v432
        %1558 = vmatpush.msra.mxu0 %v428
        %1559 = vmatpush.msra.mxu0 %v424
        %1560 = vmatpush.msra.mxu0 %v420
        %1561 = vmatmul.f32.gmra.mxu0 %v1403
        %v1562 = vpop.f32.mrf.mxu0
        %v1563 = vadd.f32 0.0, %v1562
        %1564 = vmatmul.f32.gmra.mxu0 %v1405
        %v1565 = vpop.f32.mrf.mxu0
        %v1566 = vadd.f32 0.0, %v1565
        %1567 = vdwg.mxu0
        %1568 = vmatpush.msra.mxu0 %v544
        %1569 = vmatpush.msra.mxu0 %v540
        %1570 = vmatpush.msra.mxu0 %v536
        %1571 = vmatpush.msra.mxu0 %v532
        %1572 = vmatpush.msra.mxu0 %v528
        %1573 = vmatpush.msra.mxu0 %v524
        %1574 = vmatpush.msra.mxu0 %v520
        %1575 = vmatpush.msra.mxu0 %v516
        %1576 = vmatpush.msra.mxu0 %v512
        %1577 = vmatpush.msra.mxu0 %v508
        %1578 = vmatpush.msra.mxu0 %v504
        %1579 = vmatpush.msra.mxu0 %v500
        %1580 = vmatpush.msra.mxu0 %v496
        %1581 = vmatpush.msra.mxu0 %v492
        %1582 = vmatpush.msra.mxu0 %v488
        %1583 = vmatpush.msra.mxu0 %v484
        %1584 = vmatmul.f32.gmra.mxu0 %v1404
        %v1585 = vpop.f32.mrf.mxu0
        %v1586 = vadd.f32 %v1563, %v1585
        %1587 = vmatmul.f32.gmra.mxu0 %v1406
        %v1588 = vpop.f32.mrf.mxu0
        %v1589 = vadd.f32 %v1566, %v1588
        %1590 = vdwg.mxu0
        %v1591 = vmul.f32 %v963, %v1448
        %v1592 = vmul.f32 %v964, %v1494
        %v1593 = vmul.f32 %v965, %v1540
        %v1594 = vmul.f32 %v966, %v1586
        %v1595 = vmul.f32 %v963, %v1451
        %v1596 = vmul.f32 %v964, %v1497
        %v1597 = vmul.f32 %v965, %v1543
        %v1598 = vmul.f32 %v966, %v1589
        %v1599 = vmul.f32 %v987, %v1448
        %v1600 = vmul.f32 %v988, %v1494
        %v1601 = vmul.f32 %v989, %v1540
        %v1602 = vmul.f32 %v990, %v1586
        %v1603 = vmul.f32 %v987, %v1451
        %v1604 = vmul.f32 %v988, %v1497
        %v1605 = vmul.f32 %v989, %v1543
        %v1606 = vmul.f32 %v990, %v1589
        %v1607 = vmul.f32 %v1011, %v1448
        %v1608 = vmul.f32 %v1012, %v1494
        %v1609 = vmul.f32 %v1013, %v1540
        %v1610 = vmul.f32 %v1014, %v1586
        %v1611 = vmul.f32 %v1011, %v1451
        %v1612 = vmul.f32 %v1012, %v1497
        %v1613 = vmul.f32 %v1013, %v1543
        %v1614 = vmul.f32 %v1014, %v1589
        %v1615 = vmul.f32 %v1035, %v1448
        %v1616 = vmul.f32 %v1036, %v1494
        %v1617 = vmul.f32 %v1037, %v1540
        %v1618 = vmul.f32 %v1038, %v1586
        %v1619 = vmul.f32 %v1035, %v1451
        %v1620 = vmul.f32 %v1036, %v1497
        %v1621 = vmul.f32 %v1037, %v1543
        %v1622 = vmul.f32 %v1038, %v1589
        %v1623 = vld [vmem:[%s4 + $0x30] sm:$0xff]
        %vm1624 = vcmask 654336
        %v1626 = vsel %vm1624, %v1623, 0
        %1628 = vmatpush.msra.mxu0 0.0
        %1629 = vmatpush.msra.mxu0 0.0
        %1630 = vmatpush.msra.mxu0 0.0
        %1631 = vmatpush.msra.mxu0 0.0
        %1632 = vmatpush.msra.mxu0 0.0
        %1633 = vmatpush.msra.mxu0 0.0
        %1634 = vmatpush.msra.mxu0 %v1619
        %1635 = vmatpush.msra.mxu0 %v1615
        %1636 = vmatpush.msra.mxu0 %v1611
        %1637 = vmatpush.msra.mxu0 %v1607
        %1638 = vmatpush.msra.mxu0 %v1603
        %1639 = vmatpush.msra.mxu0 %v1599
        %1640 = vmatpush.msra.mxu0 %v1595
        %1641 = vmatpush.msra.mxu0 %v1591
        %1642 = vmatpush.msra.mxu0 %v1451
        %1643 = vmatpush.msra.mxu0 %v1448
        %1644 = vmatmul.f32.gmra.mxu0 %v1626
        %v1645 = vpop.f32.mrf.mxu0
        %v1646 = vadd.f32 0.0, %v1645
        %1647 = vdwg.mxu0
        %1648 = vmatpush.msra.mxu0 0.0
        %1649 = vmatpush.msra.mxu0 0.0
        %1650 = vmatpush.msra.mxu0 0.0
        %1651 = vmatpush.msra.mxu0 0.0
        %1652 = vmatpush.msra.mxu0 0.0
        %1653 = vmatpush.msra.mxu0 0.0
        %1654 = vmatpush.msra.mxu0 %v1620
        %1655 = vmatpush.msra.mxu0 %v1616
        %1656 = vmatpush.msra.mxu0 %v1612
        %1657 = vmatpush.msra.mxu0 %v1608
        %1658 = vmatpush.msra.mxu0 %v1604
        %1659 = vmatpush.msra.mxu0 %v1600
        %1660 = vmatpush.msra.mxu0 %v1596
        %1661 = vmatpush.msra.mxu0 %v1592
        %1662 = vmatpush.msra.mxu0 %v1497
        %1663 = vmatpush.msra.mxu0 %v1494
        %1664 = vmatmul.f32.gmra.mxu0 %v1626
        %v1665 = vpop.f32.mrf.mxu0
        %v1666 = vadd.f32 0.0, %v1665
        %1667 = vdwg.mxu0
        %1668 = vmatpush.msra.mxu0 0.0
        %1669 = vmatpush.msra.mxu0 0.0
        %1670 = vmatpush.msra.mxu0 0.0
        %1671 = vmatpush.msra.mxu0 0.0
        %1672 = vmatpush.msra.mxu0 0.0
        %1673 = vmatpush.msra.mxu0 0.0
        %1674 = vmatpush.msra.mxu0 %v1621
        %1675 = vmatpush.msra.mxu0 %v1617
        %1676 = vmatpush.msra.mxu0 %v1613
        %1677 = vmatpush.msra.mxu0 %v1609
        %1678 = vmatpush.msra.mxu0 %v1605
        %1679 = vmatpush.msra.mxu0 %v1601
        %1680 = vmatpush.msra.mxu0 %v1597
        %1681 = vmatpush.msra.mxu0 %v1593
        %1682 = vmatpush.msra.mxu0 %v1543
        %1683 = vmatpush.msra.mxu0 %v1540
        %1684 = vmatmul.f32.gmra.mxu0 %v1626
        %v1685 = vpop.f32.mrf.mxu0
        %v1686 = vadd.f32 0.0, %v1685
        %1687 = vdwg.mxu0
        %1688 = vmatpush.msra.mxu0 0.0
        %1689 = vmatpush.msra.mxu0 0.0
        %1690 = vmatpush.msra.mxu0 0.0
        %1691 = vmatpush.msra.mxu0 0.0
        %1692 = vmatpush.msra.mxu0 0.0
        %1693 = vmatpush.msra.mxu0 0.0
        %1694 = vmatpush.msra.mxu0 %v1622
        %1695 = vmatpush.msra.mxu0 %v1618
        %1696 = vmatpush.msra.mxu0 %v1614
        %1697 = vmatpush.msra.mxu0 %v1610
        %1698 = vmatpush.msra.mxu0 %v1606
        %1699 = vmatpush.msra.mxu0 %v1602
        %1700 = vmatpush.msra.mxu0 %v1598
        %1701 = vmatpush.msra.mxu0 %v1594
        %1702 = vmatpush.msra.mxu0 %v1589
        %1703 = vmatpush.msra.mxu0 %v1586
        %1704 = vmatmul.f32.gmra.mxu0 %v1626
        %v1705 = vpop.f32.mrf.mxu0
        %v1706 = vadd.f32 0.0, %v1705
        %1707 = vdwg.mxu0
        %v1708 = vld [vmem:[%s4 + $0x38] sm:$0xff]
        %vm1709 = vcmask 130048
        %v1711 = vsel %vm1709, %v1708, 0
        %1713 = vmatpush.msra.mxu0 0.0
        %1714 = vmatpush.msra.mxu0 0.0
        %1715 = vmatpush.msra.mxu0 0.0
        %1716 = vmatpush.msra.mxu0 0.0
        %1717 = vmatpush.msra.mxu0 0.0
        %1718 = vmatpush.msra.mxu0 0.0
        %1719 = vmatpush.msra.mxu0 0.0
        %1720 = vmatpush.msra.mxu0 0.0
        %1721 = vmatpush.msra.mxu0 0.0
        %1722 = vmatpush.msra.mxu0 0.0
        %1723 = vmatpush.msra.mxu0 0.0
        %1724 = vmatpush.msra.mxu0 0.0
        %1725 = vmatpush.msra.mxu0 0.0
        %1726 = vmatpush.msra.mxu0 0.0
        %1727 = vmatpush.msra.mxu0 %v1405
        %1728 = vmatpush.msra.mxu0 %v1403
        %1729 = vmatmul.f32.gmra.mxu0 %v1711
        %v1730 = vpop.f32.mrf.mxu0
        %v1731 = vadd.f32 0.0, %v1730
        %1732 = vdwg.mxu0
        %1733 = vmatpush.msra.mxu0 0.0
        %1734 = vmatpush.msra.mxu0 0.0
        %1735 = vmatpush.msra.mxu0 0.0
        %1736 = vmatpush.msra.mxu0 0.0
        %1737 = vmatpush.msra.mxu0 0.0
        %1738 = vmatpush.msra.mxu0 0.0
        %1739 = vmatpush.msra.mxu0 0.0
        %1740 = vmatpush.msra.mxu0 0.0
        %1741 = vmatpush.msra.mxu0 0.0
        %1742 = vmatpush.msra.mxu0 0.0
        %1743 = vmatpush.msra.mxu0 0.0
        %1744 = vmatpush.msra.mxu0 0.0
        %1745 = vmatpush.msra.mxu0 0.0
        %1746 = vmatpush.msra.mxu0 0.0
        %1747 = vmatpush.msra.mxu0 %v1406
        %1748 = vmatpush.msra.mxu0 %v1404
        %1749 = vmatmul.f32.gmra.mxu0 %v1711
        %v1750 = vpop.f32.mrf.mxu0
        %v1751 = vadd.f32 0.0, %v1750
        %1752 = vdwg.mxu0
        %1753 = vmatpush.msra.mxu0 %v639
        %1754 = vmatpush.msra.mxu0 %v637
        %1755 = vmatpush.msra.mxu0 %v635
        %1756 = vmatpush.msra.mxu0 %v633
        %1757 = vmatpush.msra.mxu0 %v631
        %1758 = vmatpush.msra.mxu0 %v629
        %1759 = vmatpush.msra.mxu0 %v627
        %1760 = vmatpush.msra.mxu0 %v625
        %1761 = vmatpush.msra.mxu0 %v623
        %1762 = vmatpush.msra.mxu0 %v621
        %1763 = vmatpush.msra.mxu0 %v619
        %1764 = vmatpush.msra.mxu0 %v617
        %1765 = vmatpush.msra.mxu0 %v615
        %1766 = vmatpush.msra.mxu0 %v613
        %1767 = vmatpush.msra.mxu0 %v611
        %1768 = vmatpush.msra.mxu0 %v609
        %1769 = vmatmul.f32.gmra.mxu0 %v1646
        %v1770 = vpop.f32.mrf.mxu0
        %v1771 = vadd.f32 %v1731, %v1770
        %1772 = vdwg.mxu0
        %1773 = vmatpush.msra.mxu0 %v671
        %1774 = vmatpush.msra.mxu0 %v669
        %1775 = vmatpush.msra.mxu0 %v667
        %1776 = vmatpush.msra.mxu0 %v665
        %1777 = vmatpush.msra.mxu0 %v663
        %1778 = vmatpush.msra.mxu0 %v661
        %1779 = vmatpush.msra.mxu0 %v659
        %1780 = vmatpush.msra.mxu0 %v657
        %1781 = vmatpush.msra.mxu0 %v655
        %1782 = vmatpush.msra.mxu0 %v653
        %1783 = vmatpush.msra.mxu0 %v651
        %1784 = vmatpush.msra.mxu0 %v649
        %1785 = vmatpush.msra.mxu0 %v647
        %1786 = vmatpush.msra.mxu0 %v645
        %1787 = vmatpush.msra.mxu0 %v643
        %1788 = vmatpush.msra.mxu0 %v641
        %1789 = vmatmul.f32.gmra.mxu0 %v1666
        %v1790 = vpop.f32.mrf.mxu0
        %v1791 = vadd.f32 %v1771, %v1790
        %1792 = vdwg.mxu0
        %1793 = vmatpush.msra.mxu0 %v703
        %1794 = vmatpush.msra.mxu0 %v701
        %1795 = vmatpush.msra.mxu0 %v699
        %1796 = vmatpush.msra.mxu0 %v697
        %1797 = vmatpush.msra.mxu0 %v695
        %1798 = vmatpush.msra.mxu0 %v693
        %1799 = vmatpush.msra.mxu0 %v691
        %1800 = vmatpush.msra.mxu0 %v689
        %1801 = vmatpush.msra.mxu0 %v687
        %1802 = vmatpush.msra.mxu0 %v685
        %1803 = vmatpush.msra.mxu0 %v683
        %1804 = vmatpush.msra.mxu0 %v681
        %1805 = vmatpush.msra.mxu0 %v679
        %1806 = vmatpush.msra.mxu0 %v677
        %1807 = vmatpush.msra.mxu0 %v675
        %1808 = vmatpush.msra.mxu0 %v673
        %1809 = vmatmul.f32.gmra.mxu0 %v1686
        %v1810 = vpop.f32.mrf.mxu0
        %v1811 = vadd.f32 %v1791, %v1810
        %1812 = vdwg.mxu0
        %1813 = vmatpush.msra.mxu0 %v735
        %1814 = vmatpush.msra.mxu0 %v733
        %1815 = vmatpush.msra.mxu0 %v731
        %1816 = vmatpush.msra.mxu0 %v729
        %1817 = vmatpush.msra.mxu0 %v727
        %1818 = vmatpush.msra.mxu0 %v725
        %1819 = vmatpush.msra.mxu0 %v723
        %1820 = vmatpush.msra.mxu0 %v721
        %1821 = vmatpush.msra.mxu0 %v719
        %1822 = vmatpush.msra.mxu0 %v717
        %1823 = vmatpush.msra.mxu0 %v715
        %1824 = vmatpush.msra.mxu0 %v713
        %1825 = vmatpush.msra.mxu0 %v711
        %1826 = vmatpush.msra.mxu0 %v709
        %1827 = vmatpush.msra.mxu0 %v707
        %1828 = vmatpush.msra.mxu0 %v705
        %1829 = vmatmul.f32.gmra.mxu0 %v1706
        %v1830 = vpop.f32.mrf.mxu0
        %v1831 = vadd.f32 %v1811, %v1830
        %1832 = vdwg.mxu0
        %1833 = vmatpush.msra.mxu0 %v640
        %1834 = vmatpush.msra.mxu0 %v638
        %1835 = vmatpush.msra.mxu0 %v636
        %1836 = vmatpush.msra.mxu0 %v634
        %1837 = vmatpush.msra.mxu0 %v632
        %1838 = vmatpush.msra.mxu0 %v630
        %1839 = vmatpush.msra.mxu0 %v628
        %1840 = vmatpush.msra.mxu0 %v626
        %1841 = vmatpush.msra.mxu0 %v624
        %1842 = vmatpush.msra.mxu0 %v622
        %1843 = vmatpush.msra.mxu0 %v620
        %1844 = vmatpush.msra.mxu0 %v618
        %1845 = vmatpush.msra.mxu0 %v616
        %1846 = vmatpush.msra.mxu0 %v614
        %1847 = vmatpush.msra.mxu0 %v612
        %1848 = vmatpush.msra.mxu0 %v610
        %1849 = vmatmul.f32.gmra.mxu0 %v1646
        %v1850 = vpop.f32.mrf.mxu0
        %v1851 = vadd.f32 %v1751, %v1850
        %1852 = vdwg.mxu0
        %1853 = vmatpush.msra.mxu0 %v672
        %1854 = vmatpush.msra.mxu0 %v670
        %1855 = vmatpush.msra.mxu0 %v668
        %1856 = vmatpush.msra.mxu0 %v666
        %1857 = vmatpush.msra.mxu0 %v664
        %1858 = vmatpush.msra.mxu0 %v662
        %1859 = vmatpush.msra.mxu0 %v660
        %1860 = vmatpush.msra.mxu0 %v658
        %1861 = vmatpush.msra.mxu0 %v656
        %1862 = vmatpush.msra.mxu0 %v654
        %1863 = vmatpush.msra.mxu0 %v652
        %1864 = vmatpush.msra.mxu0 %v650
        %1865 = vmatpush.msra.mxu0 %v648
        %1866 = vmatpush.msra.mxu0 %v646
        %1867 = vmatpush.msra.mxu0 %v644
        %1868 = vmatpush.msra.mxu0 %v642
        %1869 = vmatmul.f32.gmra.mxu0 %v1666
        %v1870 = vpop.f32.mrf.mxu0
        %v1871 = vadd.f32 %v1851, %v1870
        %1872 = vdwg.mxu0
        %1873 = vmatpush.msra.mxu0 %v704
        %1874 = vmatpush.msra.mxu0 %v702
        %1875 = vmatpush.msra.mxu0 %v700
        %1876 = vmatpush.msra.mxu0 %v698
        %1877 = vmatpush.msra.mxu0 %v696
        %1878 = vmatpush.msra.mxu0 %v694
        %1879 = vmatpush.msra.mxu0 %v692
        %1880 = vmatpush.msra.mxu0 %v690
        %1881 = vmatpush.msra.mxu0 %v688
        %1882 = vmatpush.msra.mxu0 %v686
        %1883 = vmatpush.msra.mxu0 %v684
        %1884 = vmatpush.msra.mxu0 %v682
        %1885 = vmatpush.msra.mxu0 %v680
        %1886 = vmatpush.msra.mxu0 %v678
        %1887 = vmatpush.msra.mxu0 %v676
        %1888 = vmatpush.msra.mxu0 %v674
        %1889 = vmatmul.f32.gmra.mxu0 %v1686
        %v1890 = vpop.f32.mrf.mxu0
        %v1891 = vadd.f32 %v1871, %v1890
        %1892 = vdwg.mxu0
        %1893 = vmatpush.msra.mxu0 %v736
        %1894 = vmatpush.msra.mxu0 %v734
        %1895 = vmatpush.msra.mxu0 %v732
        %1896 = vmatpush.msra.mxu0 %v730
        %1897 = vmatpush.msra.mxu0 %v728
        %1898 = vmatpush.msra.mxu0 %v726
        %1899 = vmatpush.msra.mxu0 %v724
        %1900 = vmatpush.msra.mxu0 %v722
        %1901 = vmatpush.msra.mxu0 %v720
        %1902 = vmatpush.msra.mxu0 %v718
        %1903 = vmatpush.msra.mxu0 %v716
        %1904 = vmatpush.msra.mxu0 %v714
        %1905 = vmatpush.msra.mxu0 %v712
        %1906 = vmatpush.msra.mxu0 %v710
        %1907 = vmatpush.msra.mxu0 %v708
        %1908 = vmatpush.msra.mxu0 %v706
        %1909 = vmatmul.f32.gmra.mxu0 %v1706
        %v1910 = vpop.f32.mrf.mxu0
        %v1911 = vadd.f32 %v1891, %v1910
        %1912 = vdwg.mxu0
        %v1913 = vld [vmem:[%s4 + $0x40] sm:$0xff]
        %1915 = vset.pattern.permute.xlu0 0
        %1916 = vperm.xlu0 %1915, %v1913
        %v1917 = vpop.permute.xlu0 %1916
        %v1919 = vadd.f32 %v1831, %v1917
        %v1920 = vadd.f32 %v1911, %v1917
        %v1921 = vld [vmem:[%s5] sm:$0xff]
        %v1922 = vld [vmem:[%s5 + $0x8] sm:$0xff]
        %v1923 = vld [vmem:[%s5 + $0x10] sm:$0xff]
        %v1924 = vld [vmem:[%s5 + $0x18] sm:$0xff]
        %v1925 = vld [vmem:[%s5 + $0x20] sm:$0xff]
        %v1926 = vld [vmem:[%s5 + $0x28] sm:$0xff]
        %v1927 = vld [vmem:[%s5 + $0x30] sm:$0xff]
        %v1928 = vld [vmem:[%s5 + $0x38] sm:$0xff]
        %v1929 = vld [vmem:[%s5 + $0x40] sm:$0xff]
        %v1930 = vld [vmem:[%s5 + $0x48] sm:$0xff]
        %v1931 = vld [vmem:[%s5 + $0x50] sm:$0xff]
        %v1932 = vld [vmem:[%s5 + $0x58] sm:$0xff]
        %v1933 = vld [vmem:[%s5 + $0x60] sm:$0xff]
        %v1934 = vld [vmem:[%s5 + $0x68] sm:$0xff]
        %v1935 = vld [vmem:[%s5 + $0x70] sm:$0xff]
        %v1936 = vld [vmem:[%s5 + $0x78] sm:$0xff]
        %v1937 = vld [vmem:[%s5 + $0x80] sm:$0xff]
        %v1938 = vld [vmem:[%s5 + $0x88] sm:$0xff]
        %v1939 = vld [vmem:[%s5 + $0x90] sm:$0xff]
        %v1940 = vld [vmem:[%s5 + $0x98] sm:$0xff]
        %v1941 = vld [vmem:[%s5 + $0xa0] sm:$0xff]
        %v1942 = vld [vmem:[%s5 + $0xa8] sm:$0xff]
        %v1943 = vld [vmem:[%s5 + $0xb0] sm:$0xff]
        %v1944 = vld [vmem:[%s5 + $0xb8] sm:$0xff]
        %v1945 = vld [vmem:[%s5 + $0xc0] sm:$0xff]
        %v1946 = vld [vmem:[%s5 + $0xc8] sm:$0xff]
        %v1947 = vld [vmem:[%s5 + $0xd0] sm:$0xff]
        %v1948 = vld [vmem:[%s5 + $0xd8] sm:$0xff]
        %v1949 = vld [vmem:[%s5 + $0xe0] sm:$0xff]
        %v1950 = vld [vmem:[%s5 + $0xe8] sm:$0xff]
        %v1951 = vld [vmem:[%s5 + $0xf0] sm:$0xff]
        %v1952 = vld [vmem:[%s5 + $0xf8] sm:$0xff]
        %1953 = vmatpush.msra.mxu0 %v1936
        %1954 = vmatpush.msra.mxu0 %v1935
        %1955 = vmatpush.msra.mxu0 %v1934
        %1956 = vmatpush.msra.mxu0 %v1933
        %1957 = vmatpush.msra.mxu0 %v1932
        %1958 = vmatpush.msra.mxu0 %v1931
        %1959 = vmatpush.msra.mxu0 %v1930
        %1960 = vmatpush.msra.mxu0 %v1929
        %1961 = vmatpush.msra.mxu0 %v1928
        %1962 = vmatpush.msra.mxu0 %v1927
        %1963 = vmatpush.msra.mxu0 %v1926
        %1964 = vmatpush.msra.mxu0 %v1925
        %1965 = vmatpush.msra.mxu0 %v1924
        %1966 = vmatpush.msra.mxu0 %v1923
        %1967 = vmatpush.msra.mxu0 %v1922
        %1968 = vmatpush.msra.mxu0 %v1921
        %1969 = vmatmul.f32.gmra.mxu0 %v1919
        %v1970 = vpop.f32.mrf.mxu0
        %v1971 = vadd.f32 0.0, %v1970
        %1972 = vdwg.mxu0
        %1973 = vmatpush.msra.mxu0 %v1952
        %1974 = vmatpush.msra.mxu0 %v1951
        %1975 = vmatpush.msra.mxu0 %v1950
        %1976 = vmatpush.msra.mxu0 %v1949
        %1977 = vmatpush.msra.mxu0 %v1948
        %1978 = vmatpush.msra.mxu0 %v1947
        %1979 = vmatpush.msra.mxu0 %v1946
        %1980 = vmatpush.msra.mxu0 %v1945
        %1981 = vmatpush.msra.mxu0 %v1944
        %1982 = vmatpush.msra.mxu0 %v1943
        %1983 = vmatpush.msra.mxu0 %v1942
        %1984 = vmatpush.msra.mxu0 %v1941
        %1985 = vmatpush.msra.mxu0 %v1940
        %1986 = vmatpush.msra.mxu0 %v1939
        %1987 = vmatpush.msra.mxu0 %v1938
        %1988 = vmatpush.msra.mxu0 %v1937
        %1989 = vmatmul.f32.gmra.mxu0 %v1920
        %v1990 = vpop.f32.mrf.mxu0
        %v1991 = vadd.f32 %v1971, %v1990
        %1992 = vdwg.mxu0
        %v1993 = vld [vmem:[%s4 + $0x48] sm:$0xff]
        %v1994 = vld [vmem:[%s4 + $0x50] sm:$0xff]
        %v1995 = vld [vmem:[%s4 + $0x58] sm:$0xff]
        %v1996 = vld [vmem:[%s4 + $0x60] sm:$0xff]
        %v1997 = vld [vmem:[%s4 + $0x68] sm:$0xff]
        %v1998 = vld [vmem:[%s4 + $0x70] sm:$0xff]
        %2000 = vset.pattern.permute.xlu0 0
        %2001 = vperm.xlu0 %2000, %v1996
        %v2002 = vpop.permute.xlu0 %2001
        %2005 = vset.pattern.permute.xlu0 0
        %2006 = vperm.xlu0 %2005, %v1997
        %v2007 = vpop.permute.xlu0 %2006
        %2010 = vset.pattern.permute.xlu0 0
        %2011 = vperm.xlu0 %2010, %v1998
        %v2012 = vpop.permute.xlu0 %2011
        %vm2014 = vcmask 64512
        %v2016 = vsel %vm2014, %v1993, 0
        %v2019 = vsel %vm2014, %v1994, 0
        %v2022 = vsel %vm2014, %v1995, 0
        %2024 = vmatpush.msra.mxu0 0.0
        %2025 = vmatpush.msra.mxu0 0.0
        %2026 = vmatpush.msra.mxu0 0.0
        %2027 = vmatpush.msra.mxu0 0.0
        %2028 = vmatpush.msra.mxu0 0.0
        %2029 = vmatpush.msra.mxu0 0.0
        %2030 = vmatpush.msra.mxu0 0.0
        %2031 = vmatpush.msra.mxu0 0.0
        %2032 = vmatpush.msra.mxu0 0.0
        %2033 = vmatpush.msra.mxu0 0.0
        %2034 = vmatpush.msra.mxu0 0.0
        %2035 = vmatpush.msra.mxu0 0.0
        %2036 = vmatpush.msra.mxu0 0.0
        %2037 = vmatpush.msra.mxu0 0.0
        %2038 = vmatpush.msra.mxu0 0.0
        %2039 = vmatpush.msra.mxu0 %v1991
        %2040 = vmatmul.f32.gmra.mxu0 %v2016
        %v2041 = vpop.f32.mrf.mxu0
        %v2042 = vadd.f32 %v2002, %v2041
        %2043 = vmatmul.f32.gmra.mxu0 %v2019
        %v2044 = vpop.f32.mrf.mxu0
        %v2045 = vadd.f32 %v2007, %v2044
        %2046 = vmatmul.f32.gmra.mxu0 %v2022
        %v2047 = vpop.f32.mrf.mxu0
        %v2048 = vadd.f32 %v2012, %v2047
        %2049 = vdwg.mxu0
        %v2050 = vmax.f32 %v2042, 0.0
        %v2051 = vmax.f32 %v2045, 0.0
        %v2052 = vmax.f32 %v2048, 0.0
        %v2053 = vld [vmem:[%s4 + $0x78] sm:$0xff]
        %v2054 = vld [vmem:[%s4 + $0x80] sm:$0xff]
        %v2055 = vld [vmem:[%s4 + $0x88] sm:$0xff]
        %v2056 = vld [vmem:[%s4 + $0x90] sm:$0xff]
        %2058 = vset.pattern.permute.xlu0 0
        %2059 = vperm.xlu0 %2058, %v2055
        %v2060 = vpop.permute.xlu0 %2059
        %2063 = vset.pattern.permute.xlu0 0
        %2064 = vperm.xlu0 %2063, %v2056
        %v2065 = vpop.permute.xlu0 %2064
        %v2068 = vsel %vm1154, %v2053, 0
        %v2071 = vsel %vm1154, %v2054, 0
        %2073 = vmatpush.msra.mxu0 0.0
        %2074 = vmatpush.msra.mxu0 0.0
        %2075 = vmatpush.msra.mxu0 0.0
        %2076 = vmatpush.msra.mxu0 0.0
        %2077 = vmatpush.msra.mxu0 0.0
        %2078 = vmatpush.msra.mxu0 0.0
        %2079 = vmatpush.msra.mxu0 0.0
        %2080 = vmatpush.msra.mxu0 0.0
        %2081 = vmatpush.msra.mxu0 0.0
        %2082 = vmatpush.msra.mxu0 0.0
        %2083 = vmatpush.msra.mxu0 0.0
        %2084 = vmatpush.msra.mxu0 0.0
        %2085 = vmatpush.msra.mxu0 0.0
        %2086 = vmatpush.msra.mxu0 %v2052
        %2087 = vmatpush.msra.mxu0 %v2051
        %2088 = vmatpush.msra.mxu0 %v2050
        %2089 = vmatmul.f32.gmra.mxu0 %v2068
        %v2090 = vpop.f32.mrf.mxu0
        %v2091 = vadd.f32 %v2060, %v2090
        %2092 = vmatmul.f32.gmra.mxu0 %v2071
        %v2093 = vpop.f32.mrf.mxu0
        %v2094 = vadd.f32 %v2065, %v2093
        %2095 = vdwg.mxu0
        %v2096 = vmax.f32 %v2091, 0.0
        %v2097 = vmax.f32 %v2094, 0.0
        %v2098 = vld [vmem:[%s4 + $0x98] sm:$0xff]
        %v2099 = vld [vmem:[%s4 + $0xa0] sm:$0xff]
        %2101 = vset.pattern.permute.xlu0 0
        %2102 = vperm.xlu0 %2101, %v2099
        %v2103 = vpop.permute.xlu0 %2102
        %v2106 = vsel %vm1709, %v2098, 0
        %2108 = vmatpush.msra.mxu0 0.0
        %2109 = vmatpush.msra.mxu0 0.0
        %2110 = vmatpush.msra.mxu0 0.0
        %2111 = vmatpush.msra.mxu0 0.0
        %2112 = vmatpush.msra.mxu0 0.0
        %2113 = vmatpush.msra.mxu0 0.0
        %2114 = vmatpush.msra.mxu0 0.0
        %2115 = vmatpush.msra.mxu0 0.0
        %2116 = vmatpush.msra.mxu0 0.0
        %2117 = vmatpush.msra.mxu0 0.0
        %2118 = vmatpush.msra.mxu0 0.0
        %2119 = vmatpush.msra.mxu0 0.0
        %2120 = vmatpush.msra.mxu0 0.0
        %2121 = vmatpush.msra.mxu0 0.0
        %2122 = vmatpush.msra.mxu0 %v2097
        %2123 = vmatpush.msra.mxu0 %v2096
        %2124 = vmatmul.f32.gmra.mxu0 %v2106
        %v2125 = vpop.f32.mrf.mxu0
        %v2126 = vadd.f32 %v2103, %v2125
        %2127 = vdwg.mxu0
        %v2128 = vxor.u32 %v2126, 2147483648
        %v2129 = vmul.f32 %v2128, 1.442695
        %v2130 = vpow.pop %v2129
        %v2131 = vadd.f32 %v2130, 1.0
        %v2132 = vrcp.pop %v2131
        %v2133 = vmul.f32 %v2131, %v2132
        %v2134 = vsub.f32 1.0, %v2133
        %v2135 = vmul.f32 %v2132, %v2134
        %v2136 = vadd.f32 %v2132, %v2135
        %vm2137 = vweird.f32 %v2131
        %vm2138 = vweird.f32 %v2132
        %vm2139 = vmor %vm2137, %vm2138
        %v2140 = vsel %vm2139, %v2132, %v2136
        %v2141 = vand.u32 2147483647, %v2131
        %vm2142 = vcmp.eq.f32.partialorder %v2141, 8.507059e+37
        %v2143 = vand.u32 %v2131, 2147483648
        %v2144 = vor.u32 1.1754944e-38, %v2143
        %v2145 = vsel %vm2142, %v2144, %v2140
        %v2146 = vmul.f32 1.0, %v2145
        %vm2147 = vcmask 253952
        %2148 = vst.msk [vmem:[%s342] sm:$0x1] %vm2147, %v2146
        %s2149 = sand.u32 %s180, 1
        %s2150 = scalar_lea.sflag [#allocation4], %s2149
        %s2151 = sand.u32 %s180, 1
        %s2152 = scalar_lea.vmem [#allocation7], %s2151
        // Predicated region
        $region53: #{tpu_custom_call.1} parent=43 // pred_check
          %p2153 = pneg %p190
        $region54: #{tpu_custom_call.1} parent=43 // pred_check_branch
          %2155 = sbr.rel (%p2153) target = $region56
        $region55: #{tpu_custom_call.1} parent=43 // pred_region
          %2157 = vsyncadd %s2150, 0
          %s2158 = scalar_lea.hbm %s6, %s26
          %s2160 = sshll.u32 %s2152, 4
          %s2161 = int_to_ptr.vmem [resolvable:$true] %s2160
          %s2162 = sshll.u32 %s2158, 4
          %s2163 = int_to_ptr.hbm [resolvable:$true] %s2162
          %2165 = dma.vmem_to_hbm [thread:$0]  %s2161, 16, %s2163, %s2150
        $region56: #{tpu_custom_call.1} parent=43 // pred_fallthru
          _
      $region44: #{tpu_custom_call.1} parent=5 // pred_fallthru
        _
      %p2166 = scmp.le.s32.totalorder 2, %s21
      // Predicated region
      $region57: #{tpu_custom_call.1} parent=5 // pred_check
        %p2167 = pneg %p2166
      $region58: #{tpu_custom_call.1} parent=5 // pred_check_branch
        %2169 = sbr.rel (%p2167) target = $region60
      $region59: #{tpu_custom_call.1} parent=5 // pred_region
        %s2170 = ssub.s32 %s21, 2
        // Predicated region
        $region61: #{tpu_custom_call.1} parent=59 // pred_check
          %p2171 = pneg %p196
        $region62: #{tpu_custom_call.1} parent=59 // pred_check_branch
          %2173 = sbr.rel (%p2171) target = $region64
        $region63: #{tpu_custom_call.1} parent=59 // pred_region
          %s2174 = sand.u32 %s181, 1
          %s2175 = scalar_lea.sflag [#allocation4], %s2174
          %s2176 = sand.u32 %s181, 1
          %s2177 = scalar_lea.vmem [#allocation7], %s2176
          %2179 = dma.done %s2175, 16
        $region64: #{tpu_custom_call.1} parent=59 // pred_fallthru
          _
      $region60: #{tpu_custom_call.1} parent=5 // pred_fallthru
        _
    $region6: #{tpu_custom_call.1} parent=1 // loop_footer
      %s25 = sadd.s32 1, %s21
    $region7: #{tpu_custom_call.1} parent=1 // loop_footer_branch
      %20 = sbr.rel target = $region3
    $region8: #{tpu_custom_call.1} parent=1 // loop_exit
      _
    %2180 = vsyncpa [#allocation3], 1
    %s2181 = scalar_lea.sflag [#allocation3], 1
    %2182 = vsyncpa %s2181, 1
    %2183 = vsyncpa [#allocation6], 1
    %s2184 = scalar_lea.sflag [#allocation6], 1
    %2185 = vsyncpa %s2184, 1
    %2186 = vsyncpa [#allocation4], 1
    %s2187 = scalar_lea.sflag [#allocation4], 1
    %2188 = vsyncpa %s2187, 1

</llo_original>
